<compile_context>
chip_gen: v7x
topology: tpu7x:2x2x1
jax: 0.10.0
libtpu: 0.0.40
codegen_flags: <defaults>
</compile_context>

<pallas_src>
import functools

import jax
import jax.numpy as jnp
from jax.experimental import pallas as pl
from jax.experimental.pallas import tpu as pltpu

H = 64            # GRU hidden size (fixed by the module)
C1 = 32           # conv1 out channels
C2 = 64           # conv2 out channels
FC = 128          # fc size
NPOL = 3          # policy head size (hard-coded in the module)
NVAL = 1          # value head size
NOUT = 8          # padded fused-head output width (policy at 0:3, value at 3:4)
GATES = 3 * H     # 192 == GRU-slab width (gates tight at lane offsets 0/64/128)
WMAIN_W = 128     # main-slab width


def _round8(n):
    return ((n + 7) // 8) * 8


def _main_layout(cin):
    """Row offsets inside the 128-wide main slab (shared by packer & kernel)."""
    cin8 = _round8(cin)
    lay = {}
    r = 0
    lay["w1"] = r; r += 3 * cin8      # conv1: 3 taps, (cin, 32) each, 8-aligned rows
    lay["w2"] = r; r += 3 * C1        # conv2: 3 taps, (32, 64) each
    lay["wfc"] = r; r += H            # fc weight (64, 128)
    lay["wheadT"] = r; r += NOUT      # fused policy+value head, TRANSPOSED (8, 128)
    lay["bias"] = r; r += 8           # rows: b1, b2, bfc, bhead
    return lay, r, cin8


_GRU_ROWS = 2 * H + 8                 # wih(64) + whh(64) + bih/bhh rows (8-padded)


def _a3c_kernel(x_ref, wmain_ref, wgru_ref, out_ref, *, batch, seqlen, cin):
    B, L = batch, seqlen
    nrows = B * L
    f32 = jnp.float32
    lay, _, cin8 = _main_layout(cin)
    rb = lay["bias"]

    # Temporal shifts on time-major rows (row = l*B + b).  Matmuls are per-row,
    # so shifting the matmul *result* equals shifting the conv input.
    def shift_down(a):   # out[row] = a[row - B];  rows with l == 0 get zeros
        return jnp.concatenate(
            [jnp.zeros((B, a.shape[1]), f32), a[:nrows - B, :]], axis=0)

    def shift_up(a):     # out[row] = a[row + B];  rows with l == L-1 get zeros
        return jnp.concatenate(
            [a[B:, :], jnp.zeros((B, a.shape[1]), f32)], axis=0)

    # ---------- conv1: 3 per-tap matmuls, accumulated in f32 ----------
    x = x_ref[...]                                            # (L*B, cin)
    w1 = [wmain_ref[lay["w1"] + k * cin8: lay["w1"] + k * cin8 + cin, 0:C1]
          for k in range(3)]
    b1 = wmain_ref[rb + 0: rb + 1, 0:C1]
    y1 = jnp.dot(x, w1[1], preferred_element_type=f32) + b1           # center tap
    y1 = y1 + shift_down(jnp.dot(x, w1[0], preferred_element_type=f32))   # tap l-1
    y1 = y1 + shift_up(jnp.dot(x, w1[2], preferred_element_type=f32))     # tap l+1
    y1 = jnp.maximum(y1, 0.0)                                 # (L*B, 32)

    # ---------- conv2: same 3-tap pattern ----------
    w2 = [wmain_ref[lay["w2"] + k * C1: lay["w2"] + (k + 1) * C1, 0:C2]
          for k in range(3)]
    b2 = wmain_ref[rb + 1: rb + 2, 0:C2]
    y2 = jnp.dot(y1, w2[1], preferred_element_type=f32) + b2
    y2 = y2 + shift_down(jnp.dot(y1, w2[0], preferred_element_type=f32))
    y2 = y2 + shift_up(jnp.dot(y1, w2[2], preferred_element_type=f32))
    y2 = jnp.maximum(y2, 0.0)                                 # (L*B, 64)

    # ---------- GRU: hoisted input projection + K=64 serial recurrence ----------
    wih = wgru_ref[0:H, :]                                    # (64, 192)
    whh = wgru_ref[H:2 * H, :]                                # (64, 192)
    bih = wgru_ref[2 * H:2 * H + 1, :]                        # (1, 192)
    bhh = wgru_ref[2 * H + 1:2 * H + 2, :]                    # (1, 192)
    gi_all = jnp.dot(y2, wih, preferred_element_type=f32) + bih   # (L*B, 192)

    h = jnp.zeros((B, H), f32)
    # L is small (=8): static unroll; use lax.fori_loop for long sequences.
    for t in range(L):
        gi = gi_all[t * B:(t + 1) * B, :]                     # (B, 192) static slice
        gh = jnp.dot(h, whh, preferred_element_type=f32) + bhh
        r = jax.nn.sigmoid(gi[:, 0:H] + gh[:, 0:H])
        z = jax.nn.sigmoid(gi[:, H:2 * H] + gh[:, H:2 * H])
        ng = jnp.tanh(gi[:, 2 * H:3 * H] + r * gh[:, 2 * H:3 * H])
        h = (1.0 - z) * ng + z * h

    # ---------- fc + fused policy/value head ----------
    wfc = wmain_ref[lay["wfc"]:lay["wfc"] + H, 0:FC]          # (64, 128)
    bfc = wmain_ref[rb + 2: rb + 3, 0:FC]
    f = jnp.maximum(jnp.dot(h, wfc, preferred_element_type=f32) + bfc, 0.0)  # (B,128)

    whead_t = wmain_ref[lay["wheadT"]:lay["wheadT"] + NOUT, 0:FC]   # (8, 128)
    bhead = wmain_ref[rb + 3: rb + 4, 0:NOUT]                        # (1, 8)
    # NT matmul: contract f dim 1 with whead_t dim 1 (head stored transposed).
    out_ref[...] = jax.lax.dot_general(
        f, whead_t, (((1,), (1,)), ((), ())),
        preferred_element_type=f32) + bhead                          # (B, 8)


def init_params(key, input_channels):
    """Parameters in the 'natural' pre-transposed format (used by the reference)."""
    ks = jax.random.split(key, 14)
    s = 0.1
    return {
        "w1": jax.random.normal(ks[0], (3, input_channels, C1), jnp.float32) * s,
        "b1": jax.random.normal(ks[1], (1, C1), jnp.float32) * s,
        "w2": jax.random.normal(ks[2], (3, C1, C2), jnp.float32) * s,
        "b2": jax.random.normal(ks[3], (1, C2), jnp.float32) * s,
        "wih": jax.random.normal(ks[4], (C2, 3 * H), jnp.float32) * s,
        "whh": jax.random.normal(ks[5], (H, 3 * H), jnp.float32) * s,
        "bih": jax.random.normal(ks[6], (1, 3 * H), jnp.float32) * s,
        "bhh": jax.random.normal(ks[7], (1, 3 * H), jnp.float32) * s,
        "wfc": jax.random.normal(ks[8], (H, FC), jnp.float32) * s,
        "bfc": jax.random.normal(ks[9], (1, FC), jnp.float32) * s,
        "wp": jax.random.normal(ks[10], (FC, NPOL), jnp.float32) * s,
        "bp": jax.random.normal(ks[11], (1, NPOL), jnp.float32) * s,
        "wv": jax.random.normal(ks[12], (FC, NVAL), jnp.float32) * s,
        "bv": jax.random.normal(ks[13], (1, NVAL), jnp.float32) * s,
    }


def pack_params(p, cin):
    """Pack into (wmain, wgru): a (rows,128) slab + a (136,192) GRU slab, f32."""
    lay, nrows, cin8 = _main_layout(cin)
    wm = jnp.zeros((nrows, WMAIN_W), jnp.float32)
    for k in range(3):
        wm = wm.at[lay["w1"] + k * cin8: lay["w1"] + k * cin8 + cin, :C1].set(p["w1"][k])
        wm = wm.at[lay["w2"] + k * C1: lay["w2"] + (k + 1) * C1, :C2].set(p["w2"][k])
    wm = wm.at[lay["wfc"]:lay["wfc"] + H, :FC].set(p["wfc"])
    whead_t = (jnp.zeros((NOUT, FC), jnp.float32)
               .at[:NPOL, :].set(p["wp"].T)
               .at[NPOL:NPOL + NVAL, :].set(p["wv"].T))
    wm = wm.at[lay["wheadT"]:lay["wheadT"] + NOUT, :FC].set(whead_t)
    rb = lay["bias"]
    wm = wm.at[rb + 0, :C1].set(p["b1"][0])
    wm = wm.at[rb + 1, :C2].set(p["b2"][0])
    wm = wm.at[rb + 2, :FC].set(p["bfc"][0])
    bhead = (jnp.zeros((NOUT,), jnp.float32)
             .at[:NPOL].set(p["bp"][0]).at[NPOL:NPOL + NVAL].set(p["bv"][0]))
    wm = wm.at[rb + 3, :NOUT].set(bhead)

    wg = jnp.zeros((_GRU_ROWS, GATES), jnp.float32)
    wg = wg.at[0:H, :].set(p["wih"])
    wg = wg.at[H:2 * H, :].set(p["whh"])
    wg = wg.at[2 * H, :].set(p["bih"][0])
    wg = wg.at[2 * H + 1, :].set(p["bhh"][0])
    return wm, wg


@jax.jit
def a3c_forward(x_ncl, wmain, wgru):
    """x_ncl: (B, C_in, L) like PyTorch Conv1d input. Returns (policy_logits, value)."""
    B, Cin, L = x_ncl.shape
    n = B * L
    # Single wrapper-side op: NCL -> time-major (L*B, Cin), row = l*B + b.
    x_tm = jnp.transpose(x_ncl.astype(jnp.float32), (2, 0, 1)).reshape(n, Cin)

    flops = (2 * n * (3 * Cin * C1 + 3 * C1 * C2 + C2 * GATES + H * GATES)
             + 2 * B * (H * FC + FC * NOUT))
    cost = pl.CostEstimate(
        flops=flops,
        transcendentals=3 * n * H,
        bytes_accessed=4 * (x_tm.size + wmain.size + wgru.size + B * NOUT))

    out = pl.pallas_call(
        functools.partial(_a3c_kernel, batch=B, seqlen=L, cin=Cin),
        out_shape=jax.ShapeDtypeStruct((B, NOUT), jnp.float32),
        in_specs=[pl.BlockSpec(memory_space=pltpu.MemorySpace.VMEM)] * 3,
        out_specs=pl.BlockSpec(memory_space=pltpu.MemorySpace.VMEM),
        cost_estimate=cost,
        compiler_params=pltpu.CompilerParams(vmem_limit_bytes=8 * 1024 * 1024),
    )(x_tm, wmain, wgru)
    return out[:, :NPOL], out[:, NPOL:NPOL + NVAL]


def ref_forward(x_ncl, p):
    """Pure-JAX reference with identical semantics (for correctness check)."""
    x = jnp.transpose(x_ncl, (0, 2, 1)).astype(jnp.float32)
    B, L, _ = x.shape
    xp = jnp.pad(x, ((0, 0), (1, 1), (0, 0)))
    y1 = p["b1"] + sum(jnp.einsum("blc,co->blo", xp[:, k:k + L, :], p["w1"][k])
                       for k in range(3))
    y1 = jax.nn.relu(y1)
    y1p = jnp.pad(y1, ((0, 0), (1, 1), (0, 0)))
    y2 = p["b2"] + sum(jnp.einsum("blc,co->blo", y1p[:, k:k + L, :], p["w2"][k])
                       for k in range(3))
    y2 = jax.nn.relu(y2)
    h = jnp.zeros((B, H), jnp.float32)
    for t in range(L):
        gi = y2[:, t, :] @ p["wih"] + p["bih"]
        gh = h @ p["whh"] + p["bhh"]
        r = jax.nn.sigmoid(gi[:, :H] + gh[:, :H])
        z = jax.nn.sigmoid(gi[:, H:2 * H] + gh[:, H:2 * H])
        n = jnp.tanh(gi[:, 2 * H:] + r * gh[:, 2 * H:])
        h = (1.0 - z) * n + z * h
    f = jax.nn.relu(h @ p["wfc"] + p["bfc"])
    return f @ p["wp"] + p["bp"], f @ p["wv"] + p["bv"]


if __name__ == "__main__":
    B, C_IN, L = 2, 4, 8          # batch, input_channels, sequence_length
    key = jax.random.PRNGKey(0)
    kx, kp = jax.random.split(key)
    x = jax.random.normal(kx, (B, C_IN, L), jnp.float32)   # NCL, like PyTorch
    params = init_params(kp, C_IN)
    wmain, wgru = pack_params(params, C_IN)                # pack once, outside jit

    policy, value = a3c_forward(x, wmain, wgru)
    policy, value = jax.block_until_ready((policy, value))

    ref_policy, ref_value = ref_forward(x, params)
    assert policy.shape == (B, NPOL) and value.shape == (B, NVAL)
    assert jnp.allclose(policy, ref_policy, atol=1e-4, rtol=1e-4)
    assert jnp.allclose(value, ref_value, atol=1e-4, rtol=1e-4)

    print("KERNEL_OK")
</pallas_src>

<mosaic_0001>
module attributes {stable_mosaic.version = 11 : i64} {
  func.func @_a3c_kernel(%arg0: memref<16x4xf32, #tpu.memory_space<vmem>>, %arg1: memref<200x128xf32, #tpu.memory_space<vmem>>, %arg2: memref<136x192xf32, #tpu.memory_space<vmem>>, %arg3: memref<2x8xf32, #tpu.memory_space<vmem>>) attributes {dimension_semantics = [], scalar_prefetch = 0 : i64, scratch_operands = 0 : i64, tpu.core_type = #tpu.core_type<tc>} {
    %c0 = arith.constant 0 : index
    %c0_0 = arith.constant 0 : index
    %0 = vector.load %arg0[%c0, %c0_0] : memref<16x4xf32, #tpu.memory_space<vmem>>, vector<16x4xf32>
    %c0_1 = arith.constant 0 : index
    %c0_2 = arith.constant 0 : index
    %1 = vector.load %arg1[%c0_1, %c0_2] : memref<200x128xf32, #tpu.memory_space<vmem>>, vector<4x32xf32>
    %c8 = arith.constant 8 : index
    %c0_3 = arith.constant 0 : index
    %2 = vector.load %arg1[%c8, %c0_3] : memref<200x128xf32, #tpu.memory_space<vmem>>, vector<4x32xf32>
    %c16 = arith.constant 16 : index
    %c0_4 = arith.constant 0 : index
    %3 = vector.load %arg1[%c16, %c0_4] : memref<200x128xf32, #tpu.memory_space<vmem>>, vector<4x32xf32>
    %c192 = arith.constant 192 : index
    %c0_5 = arith.constant 0 : index
    %4 = vector.load %arg1[%c192, %c0_5] : memref<200x128xf32, #tpu.memory_space<vmem>>, vector<1x32xf32>
    %cst = arith.constant dense<0.000000e+00> : vector<16x32xf32>
    %5 = tpu.matmul %0, %2, %cst {dimension_numbers = #tpu.dot_dimension_numbers<[1], [0], [0], [1], [0, 0, 1, 1], [], []>} : vector<16x4xf32>, vector<4x32xf32>, vector<16x32xf32> -> vector<16x32xf32>
    %6 = vector.broadcast %4 : vector<1x32xf32> to vector<16x32xf32>
    %7 = arith.addf %5, %6 : vector<16x32xf32>
    %cst_6 = arith.constant dense<0.000000e+00> : vector<16x32xf32>
    %8 = tpu.matmul %0, %1, %cst_6 {dimension_numbers = #tpu.dot_dimension_numbers<[1], [0], [0], [1], [0, 0, 1, 1], [], []>} : vector<16x4xf32>, vector<4x32xf32>, vector<16x32xf32> -> vector<16x32xf32>
    %cst_7 = arith.constant 0.000000e+00 : f32
    %9 = vector.broadcast %cst_7 : f32 to vector<2x32xf32>
    %10 = vector.extract_strided_slice %8 {offsets = [0, 0], sizes = [14, 32], strides = [1, 1]} : vector<16x32xf32> to vector<14x32xf32>
    %11 = tpu.concatenate %9, %10 in 0 : vector<2x32xf32>, vector<14x32xf32> -> vector<16x32xf32>
    %12 = arith.addf %7, %11 : vector<16x32xf32>
    %cst_8 = arith.constant dense<0.000000e+00> : vector<16x32xf32>
    %13 = tpu.matmul %0, %3, %cst_8 {dimension_numbers = #tpu.dot_dimension_numbers<[1], [0], [0], [1], [0, 0, 1, 1], [], []>} : vector<16x4xf32>, vector<4x32xf32>, vector<16x32xf32> -> vector<16x32xf32>
    %14 = vector.extract_strided_slice %13 {offsets = [2, 0], sizes = [14, 32], strides = [1, 1]} : vector<16x32xf32> to vector<14x32xf32>
    %cst_9 = arith.constant 0.000000e+00 : f32
    %15 = vector.broadcast %cst_9 : f32 to vector<2x32xf32>
    %16 = tpu.concatenate %14, %15 in 0 : vector<14x32xf32>, vector<2x32xf32> -> vector<16x32xf32>
    %17 = arith.addf %12, %16 : vector<16x32xf32>
    %cst_10 = arith.constant 0.000000e+00 : f32
    %18 = vector.broadcast %cst_10 : f32 to vector<16x32xf32>
    %19 = arith.maximumf %17, %18 : vector<16x32xf32>
    %c24 = arith.constant 24 : index
    %c0_11 = arith.constant 0 : index
    %20 = vector.load %arg1[%c24, %c0_11] : memref<200x128xf32, #tpu.memory_space<vmem>>, vector<32x64xf32>
    %c56 = arith.constant 56 : index
    %c0_12 = arith.constant 0 : index
    %21 = vector.load %arg1[%c56, %c0_12] : memref<200x128xf32, #tpu.memory_space<vmem>>, vector<32x64xf32>
    %c88 = arith.constant 88 : index
    %c0_13 = arith.constant 0 : index
    %22 = vector.load %arg1[%c88, %c0_13] : memref<200x128xf32, #tpu.memory_space<vmem>>, vector<32x64xf32>
    %c193 = arith.constant 193 : index
    %c0_14 = arith.constant 0 : index
    %23 = vector.load %arg1[%c193, %c0_14] : memref<200x128xf32, #tpu.memory_space<vmem>>, vector<1x64xf32>
    %cst_15 = arith.constant dense<0.000000e+00> : vector<16x64xf32>
    %24 = tpu.matmul %19, %21, %cst_15 {dimension_numbers = #tpu.dot_dimension_numbers<[1], [0], [0], [1], [0, 0, 1, 1], [], []>} : vector<16x32xf32>, vector<32x64xf32>, vector<16x64xf32> -> vector<16x64xf32>
    %25 = vector.broadcast %23 : vector<1x64xf32> to vector<16x64xf32>
    %26 = arith.addf %24, %25 : vector<16x64xf32>
    %cst_16 = arith.constant dense<0.000000e+00> : vector<16x64xf32>
    %27 = tpu.matmul %19, %20, %cst_16 {dimension_numbers = #tpu.dot_dimension_numbers<[1], [0], [0], [1], [0, 0, 1, 1], [], []>} : vector<16x32xf32>, vector<32x64xf32>, vector<16x64xf32> -> vector<16x64xf32>
    %cst_17 = arith.constant 0.000000e+00 : f32
    %28 = vector.broadcast %cst_17 : f32 to vector<2x64xf32>
    %29 = vector.extract_strided_slice %27 {offsets = [0, 0], sizes = [14, 64], strides = [1, 1]} : vector<16x64xf32> to vector<14x64xf32>
    %30 = tpu.concatenate %28, %29 in 0 : vector<2x64xf32>, vector<14x64xf32> -> vector<16x64xf32>
    %31 = arith.addf %26, %30 : vector<16x64xf32>
    %cst_18 = arith.constant dense<0.000000e+00> : vector<16x64xf32>
    %32 = tpu.matmul %19, %22, %cst_18 {dimension_numbers = #tpu.dot_dimension_numbers<[1], [0], [0], [1], [0, 0, 1, 1], [], []>} : vector<16x32xf32>, vector<32x64xf32>, vector<16x64xf32> -> vector<16x64xf32>
    %33 = vector.extract_strided_slice %32 {offsets = [2, 0], sizes = [14, 64], strides = [1, 1]} : vector<16x64xf32> to vector<14x64xf32>
    %cst_19 = arith.constant 0.000000e+00 : f32
    %34 = vector.broadcast %cst_19 : f32 to vector<2x64xf32>
    %35 = tpu.concatenate %33, %34 in 0 : vector<14x64xf32>, vector<2x64xf32> -> vector<16x64xf32>
    %36 = arith.addf %31, %35 : vector<16x64xf32>
    %cst_20 = arith.constant 0.000000e+00 : f32
    %37 = vector.broadcast %cst_20 : f32 to vector<16x64xf32>
    %38 = arith.maximumf %36, %37 : vector<16x64xf32>
    %c0_21 = arith.constant 0 : index
    %c0_22 = arith.constant 0 : index
    %39 = vector.load %arg2[%c0_21, %c0_22] : memref<136x192xf32, #tpu.memory_space<vmem>>, vector<64x192xf32>
    %c64 = arith.constant 64 : index
    %c0_23 = arith.constant 0 : index
    %40 = vector.load %arg2[%c64, %c0_23] : memref<136x192xf32, #tpu.memory_space<vmem>>, vector<64x192xf32>
    %c128 = arith.constant 128 : index
    %c0_24 = arith.constant 0 : index
    %41 = vector.load %arg2[%c128, %c0_24] : memref<136x192xf32, #tpu.memory_space<vmem>>, vector<1x192xf32>
    %c129 = arith.constant 129 : index
    %c0_25 = arith.constant 0 : index
    %42 = vector.load %arg2[%c129, %c0_25] : memref<136x192xf32, #tpu.memory_space<vmem>>, vector<1x192xf32>
    %cst_26 = arith.constant dense<0.000000e+00> : vector<16x192xf32>
    %43 = tpu.matmul %38, %39, %cst_26 {dimension_numbers = #tpu.dot_dimension_numbers<[1], [0], [0], [1], [0, 0, 1, 1], [], []>} : vector<16x64xf32>, vector<64x192xf32>, vector<16x192xf32> -> vector<16x192xf32>
    %44 = vector.broadcast %41 : vector<1x192xf32> to vector<16x192xf32>
    %45 = arith.addf %43, %44 : vector<16x192xf32>
    %cst_27 = arith.constant 0.000000e+00 : f32
    %46 = vector.broadcast %cst_27 : f32 to vector<2x64xf32>
    %47 = vector.extract_strided_slice %45 {offsets = [0, 0], sizes = [2, 192], strides = [1, 1]} : vector<16x192xf32> to vector<2x192xf32>
    %cst_28 = arith.constant dense<0.000000e+00> : vector<2x192xf32>
    %48 = tpu.matmul %46, %40, %cst_28 {dimension_numbers = #tpu.dot_dimension_numbers<[1], [0], [0], [1], [0, 0, 1, 1], [], []>} : vector<2x64xf32>, vector<64x192xf32>, vector<2x192xf32> -> vector<2x192xf32>
    %49 = vector.broadcast %42 : vector<1x192xf32> to vector<2x192xf32>
    %50 = arith.addf %48, %49 : vector<2x192xf32>
    %51 = vector.extract_strided_slice %47 {offsets = [0, 0], sizes = [2, 64], strides = [1, 1]} : vector<2x192xf32> to vector<2x64xf32>
    %52 = vector.extract_strided_slice %50 {offsets = [0, 0], sizes = [2, 64], strides = [1, 1]} : vector<2x192xf32> to vector<2x64xf32>
    %53 = arith.addf %51, %52 : vector<2x64xf32>
    %54 = arith.negf %53 : vector<2x64xf32>
    %55 = math.exp %54 : vector<2x64xf32>
    %cst_29 = arith.constant 1.000000e+00 : f32
    %56 = vector.broadcast %cst_29 : f32 to vector<2x64xf32>
    %57 = arith.addf %56, %55 : vector<2x64xf32>
    %58 = arith.divf %56, %57 : vector<2x64xf32>
    %59 = vector.extract_strided_slice %47 {offsets = [0, 64], sizes = [2, 64], strides = [1, 1]} : vector<2x192xf32> to vector<2x64xf32>
    %60 = vector.extract_strided_slice %50 {offsets = [0, 64], sizes = [2, 64], strides = [1, 1]} : vector<2x192xf32> to vector<2x64xf32>
    %61 = arith.addf %59, %60 : vector<2x64xf32>
    %62 = arith.negf %61 : vector<2x64xf32>
    %63 = math.exp %62 : vector<2x64xf32>
    %cst_30 = arith.constant 1.000000e+00 : f32
    %64 = vector.broadcast %cst_30 : f32 to vector<2x64xf32>
    %65 = arith.addf %64, %63 : vector<2x64xf32>
    %66 = arith.divf %64, %65 : vector<2x64xf32>
    %67 = vector.extract_strided_slice %47 {offsets = [0, 128], sizes = [2, 64], strides = [1, 1]} : vector<2x192xf32> to vector<2x64xf32>
    %68 = vector.extract_strided_slice %50 {offsets = [0, 128], sizes = [2, 64], strides = [1, 1]} : vector<2x192xf32> to vector<2x64xf32>
    %69 = arith.mulf %58, %68 : vector<2x64xf32>
    %70 = arith.addf %67, %69 : vector<2x64xf32>
    %71 = math.tanh %70 : vector<2x64xf32>
    %cst_31 = arith.constant 1.000000e+00 : f32
    %72 = vector.broadcast %cst_31 : f32 to vector<2x64xf32>
    %73 = arith.subf %72, %66 : vector<2x64xf32>
    %74 = arith.mulf %73, %71 : vector<2x64xf32>
    %75 = arith.mulf %66, %46 : vector<2x64xf32>
    %76 = arith.addf %74, %75 : vector<2x64xf32>
    %77 = vector.extract_strided_slice %45 {offsets = [2, 0], sizes = [2, 192], strides = [1, 1]} : vector<16x192xf32> to vector<2x192xf32>
    %cst_32 = arith.constant dense<0.000000e+00> : vector<2x192xf32>
    %78 = tpu.matmul %76, %40, %cst_32 {dimension_numbers = #tpu.dot_dimension_numbers<[1], [0], [0], [1], [0, 0, 1, 1], [], []>} : vector<2x64xf32>, vector<64x192xf32>, vector<2x192xf32> -> vector<2x192xf32>
    %79 = vector.broadcast %42 : vector<1x192xf32> to vector<2x192xf32>
    %80 = arith.addf %78, %79 : vector<2x192xf32>
    %81 = vector.extract_strided_slice %77 {offsets = [0, 0], sizes = [2, 64], strides = [1, 1]} : vector<2x192xf32> to vector<2x64xf32>
    %82 = vector.extract_strided_slice %80 {offsets = [0, 0], sizes = [2, 64], strides = [1, 1]} : vector<2x192xf32> to vector<2x64xf32>
    %83 = arith.addf %81, %82 : vector<2x64xf32>
    %84 = arith.negf %83 : vector<2x64xf32>
    %85 = math.exp %84 : vector<2x64xf32>
    %cst_33 = arith.constant 1.000000e+00 : f32
    %86 = vector.broadcast %cst_33 : f32 to vector<2x64xf32>
    %87 = arith.addf %86, %85 : vector<2x64xf32>
    %88 = arith.divf %86, %87 : vector<2x64xf32>
    %89 = vector.extract_strided_slice %77 {offsets = [0, 64], sizes = [2, 64], strides = [1, 1]} : vector<2x192xf32> to vector<2x64xf32>
    %90 = vector.extract_strided_slice %80 {offsets = [0, 64], sizes = [2, 64], strides = [1, 1]} : vector<2x192xf32> to vector<2x64xf32>
    %91 = arith.addf %89, %90 : vector<2x64xf32>
    %92 = arith.negf %91 : vector<2x64xf32>
    %93 = math.exp %92 : vector<2x64xf32>
    %cst_34 = arith.constant 1.000000e+00 : f32
    %94 = vector.broadcast %cst_34 : f32 to vector<2x64xf32>
    %95 = arith.addf %94, %93 : vector<2x64xf32>
    %96 = arith.divf %94, %95 : vector<2x64xf32>
    %97 = vector.extract_strided_slice %77 {offsets = [0, 128], sizes = [2, 64], strides = [1, 1]} : vector<2x192xf32> to vector<2x64xf32>
    %98 = vector.extract_strided_slice %80 {offsets = [0, 128], sizes = [2, 64], strides = [1, 1]} : vector<2x192xf32> to vector<2x64xf32>
    %99 = arith.mulf %88, %98 : vector<2x64xf32>
    %100 = arith.addf %97, %99 : vector<2x64xf32>
    %101 = math.tanh %100 : vector<2x64xf32>
    %cst_35 = arith.constant 1.000000e+00 : f32
    %102 = vector.broadcast %cst_35 : f32 to vector<2x64xf32>
    %103 = arith.subf %102, %96 : vector<2x64xf32>
    %104 = arith.mulf %103, %101 : vector<2x64xf32>
    %105 = arith.mulf %96, %76 : vector<2x64xf32>
    %106 = arith.addf %104, %105 : vector<2x64xf32>
    %107 = vector.extract_strided_slice %45 {offsets = [4, 0], sizes = [2, 192], strides = [1, 1]} : vector<16x192xf32> to vector<2x192xf32>
    %cst_36 = arith.constant dense<0.000000e+00> : vector<2x192xf32>
    %108 = tpu.matmul %106, %40, %cst_36 {dimension_numbers = #tpu.dot_dimension_numbers<[1], [0], [0], [1], [0, 0, 1, 1], [], []>} : vector<2x64xf32>, vector<64x192xf32>, vector<2x192xf32> -> vector<2x192xf32>
    %109 = vector.broadcast %42 : vector<1x192xf32> to vector<2x192xf32>
    %110 = arith.addf %108, %109 : vector<2x192xf32>
    %111 = vector.extract_strided_slice %107 {offsets = [0, 0], sizes = [2, 64], strides = [1, 1]} : vector<2x192xf32> to vector<2x64xf32>
    %112 = vector.extract_strided_slice %110 {offsets = [0, 0], sizes = [2, 64], strides = [1, 1]} : vector<2x192xf32> to vector<2x64xf32>
    %113 = arith.addf %111, %112 : vector<2x64xf32>
    %114 = arith.negf %113 : vector<2x64xf32>
    %115 = math.exp %114 : vector<2x64xf32>
    %cst_37 = arith.constant 1.000000e+00 : f32
    %116 = vector.broadcast %cst_37 : f32 to vector<2x64xf32>
    %117 = arith.addf %116, %115 : vector<2x64xf32>
    %118 = arith.divf %116, %117 : vector<2x64xf32>
    %119 = vector.extract_strided_slice %107 {offsets = [0, 64], sizes = [2, 64], strides = [1, 1]} : vector<2x192xf32> to vector<2x64xf32>
    %120 = vector.extract_strided_slice %110 {offsets = [0, 64], sizes = [2, 64], strides = [1, 1]} : vector<2x192xf32> to vector<2x64xf32>
    %121 = arith.addf %119, %120 : vector<2x64xf32>
    %122 = arith.negf %121 : vector<2x64xf32>
    %123 = math.exp %122 : vector<2x64xf32>
    %cst_38 = arith.constant 1.000000e+00 : f32
    %124 = vector.broadcast %cst_38 : f32 to vector<2x64xf32>
    %125 = arith.addf %124, %123 : vector<2x64xf32>
    %126 = arith.divf %124, %125 : vector<2x64xf32>
    %127 = vector.extract_strided_slice %107 {offsets = [0, 128], sizes = [2, 64], strides = [1, 1]} : vector<2x192xf32> to vector<2x64xf32>
    %128 = vector.extract_strided_slice %110 {offsets = [0, 128], sizes = [2, 64], strides = [1, 1]} : vector<2x192xf32> to vector<2x64xf32>
    %129 = arith.mulf %118, %128 : vector<2x64xf32>
    %130 = arith.addf %127, %129 : vector<2x64xf32>
    %131 = math.tanh %130 : vector<2x64xf32>
    %cst_39 = arith.constant 1.000000e+00 : f32
    %132 = vector.broadcast %cst_39 : f32 to vector<2x64xf32>
    %133 = arith.subf %132, %126 : vector<2x64xf32>
    %134 = arith.mulf %133, %131 : vector<2x64xf32>
    %135 = arith.mulf %126, %106 : vector<2x64xf32>
    %136 = arith.addf %134, %135 : vector<2x64xf32>
    %137 = vector.extract_strided_slice %45 {offsets = [6, 0], sizes = [2, 192], strides = [1, 1]} : vector<16x192xf32> to vector<2x192xf32>
    %cst_40 = arith.constant dense<0.000000e+00> : vector<2x192xf32>
    %138 = tpu.matmul %136, %40, %cst_40 {dimension_numbers = #tpu.dot_dimension_numbers<[1], [0], [0], [1], [0, 0, 1, 1], [], []>} : vector<2x64xf32>, vector<64x192xf32>, vector<2x192xf32> -> vector<2x192xf32>
    %139 = vector.broadcast %42 : vector<1x192xf32> to vector<2x192xf32>
    %140 = arith.addf %138, %139 : vector<2x192xf32>
    %141 = vector.extract_strided_slice %137 {offsets = [0, 0], sizes = [2, 64], strides = [1, 1]} : vector<2x192xf32> to vector<2x64xf32>
    %142 = vector.extract_strided_slice %140 {offsets = [0, 0], sizes = [2, 64], strides = [1, 1]} : vector<2x192xf32> to vector<2x64xf32>
    %143 = arith.addf %141, %142 : vector<2x64xf32>
    %144 = arith.negf %143 : vector<2x64xf32>
    %145 = math.exp %144 : vector<2x64xf32>
    %cst_41 = arith.constant 1.000000e+00 : f32
    %146 = vector.broadcast %cst_41 : f32 to vector<2x64xf32>
    %147 = arith.addf %146, %145 : vector<2x64xf32>
    %148 = arith.divf %146, %147 : vector<2x64xf32>
    %149 = vector.extract_strided_slice %137 {offsets = [0, 64], sizes = [2, 64], strides = [1, 1]} : vector<2x192xf32> to vector<2x64xf32>
    %150 = vector.extract_strided_slice %140 {offsets = [0, 64], sizes = [2, 64], strides = [1, 1]} : vector<2x192xf32> to vector<2x64xf32>
    %151 = arith.addf %149, %150 : vector<2x64xf32>
    %152 = arith.negf %151 : vector<2x64xf32>
    %153 = math.exp %152 : vector<2x64xf32>
    %cst_42 = arith.constant 1.000000e+00 : f32
    %154 = vector.broadcast %cst_42 : f32 to vector<2x64xf32>
    %155 = arith.addf %154, %153 : vector<2x64xf32>
    %156 = arith.divf %154, %155 : vector<2x64xf32>
    %157 = vector.extract_strided_slice %137 {offsets = [0, 128], sizes = [2, 64], strides = [1, 1]} : vector<2x192xf32> to vector<2x64xf32>
    %158 = vector.extract_strided_slice %140 {offsets = [0, 128], sizes = [2, 64], strides = [1, 1]} : vector<2x192xf32> to vector<2x64xf32>
    %159 = arith.mulf %148, %158 : vector<2x64xf32>
    %160 = arith.addf %157, %159 : vector<2x64xf32>
    %161 = math.tanh %160 : vector<2x64xf32>
    %cst_43 = arith.constant 1.000000e+00 : f32
    %162 = vector.broadcast %cst_43 : f32 to vector<2x64xf32>
    %163 = arith.subf %162, %156 : vector<2x64xf32>
    %164 = arith.mulf %163, %161 : vector<2x64xf32>
    %165 = arith.mulf %156, %136 : vector<2x64xf32>
    %166 = arith.addf %164, %165 : vector<2x64xf32>
    %167 = vector.extract_strided_slice %45 {offsets = [8, 0], sizes = [2, 192], strides = [1, 1]} : vector<16x192xf32> to vector<2x192xf32>
    %cst_44 = arith.constant dense<0.000000e+00> : vector<2x192xf32>
    %168 = tpu.matmul %166, %40, %cst_44 {dimension_numbers = #tpu.dot_dimension_numbers<[1], [0], [0], [1], [0, 0, 1, 1], [], []>} : vector<2x64xf32>, vector<64x192xf32>, vector<2x192xf32> -> vector<2x192xf32>
    %169 = vector.broadcast %42 : vector<1x192xf32> to vector<2x192xf32>
    %170 = arith.addf %168, %169 : vector<2x192xf32>
    %171 = vector.extract_strided_slice %167 {offsets = [0, 0], sizes = [2, 64], strides = [1, 1]} : vector<2x192xf32> to vector<2x64xf32>
    %172 = vector.extract_strided_slice %170 {offsets = [0, 0], sizes = [2, 64], strides = [1, 1]} : vector<2x192xf32> to vector<2x64xf32>
    %173 = arith.addf %171, %172 : vector<2x64xf32>
    %174 = arith.negf %173 : vector<2x64xf32>
    %175 = math.exp %174 : vector<2x64xf32>
    %cst_45 = arith.constant 1.000000e+00 : f32
    %176 = vector.broadcast %cst_45 : f32 to vector<2x64xf32>
    %177 = arith.addf %176, %175 : vector<2x64xf32>
    %178 = arith.divf %176, %177 : vector<2x64xf32>
    %179 = vector.extract_strided_slice %167 {offsets = [0, 64], sizes = [2, 64], strides = [1, 1]} : vector<2x192xf32> to vector<2x64xf32>
    %180 = vector.extract_strided_slice %170 {offsets = [0, 64], sizes = [2, 64], strides = [1, 1]} : vector<2x192xf32> to vector<2x64xf32>
    %181 = arith.addf %179, %180 : vector<2x64xf32>
    %182 = arith.negf %181 : vector<2x64xf32>
    %183 = math.exp %182 : vector<2x64xf32>
    %cst_46 = arith.constant 1.000000e+00 : f32
    %184 = vector.broadcast %cst_46 : f32 to vector<2x64xf32>
    %185 = arith.addf %184, %183 : vector<2x64xf32>
    %186 = arith.divf %184, %185 : vector<2x64xf32>
    %187 = vector.extract_strided_slice %167 {offsets = [0, 128], sizes = [2, 64], strides = [1, 1]} : vector<2x192xf32> to vector<2x64xf32>
    %188 = vector.extract_strided_slice %170 {offsets = [0, 128], sizes = [2, 64], strides = [1, 1]} : vector<2x192xf32> to vector<2x64xf32>
    %189 = arith.mulf %178, %188 : vector<2x64xf32>
    %190 = arith.addf %187, %189 : vector<2x64xf32>
    %191 = math.tanh %190 : vector<2x64xf32>
    %cst_47 = arith.constant 1.000000e+00 : f32
    %192 = vector.broadcast %cst_47 : f32 to vector<2x64xf32>
    %193 = arith.subf %192, %186 : vector<2x64xf32>
    %194 = arith.mulf %193, %191 : vector<2x64xf32>
    %195 = arith.mulf %186, %166 : vector<2x64xf32>
    %196 = arith.addf %194, %195 : vector<2x64xf32>
    %197 = vector.extract_strided_slice %45 {offsets = [10, 0], sizes = [2, 192], strides = [1, 1]} : vector<16x192xf32> to vector<2x192xf32>
    %cst_48 = arith.constant dense<0.000000e+00> : vector<2x192xf32>
    %198 = tpu.matmul %196, %40, %cst_48 {dimension_numbers = #tpu.dot_dimension_numbers<[1], [0], [0], [1], [0, 0, 1, 1], [], []>} : vector<2x64xf32>, vector<64x192xf32>, vector<2x192xf32> -> vector<2x192xf32>
    %199 = vector.broadcast %42 : vector<1x192xf32> to vector<2x192xf32>
    %200 = arith.addf %198, %199 : vector<2x192xf32>
    %201 = vector.extract_strided_slice %197 {offsets = [0, 0], sizes = [2, 64], strides = [1, 1]} : vector<2x192xf32> to vector<2x64xf32>
    %202 = vector.extract_strided_slice %200 {offsets = [0, 0], sizes = [2, 64], strides = [1, 1]} : vector<2x192xf32> to vector<2x64xf32>
    %203 = arith.addf %201, %202 : vector<2x64xf32>
    %204 = arith.negf %203 : vector<2x64xf32>
    %205 = math.exp %204 : vector<2x64xf32>
    %cst_49 = arith.constant 1.000000e+00 : f32
    %206 = vector.broadcast %cst_49 : f32 to vector<2x64xf32>
    %207 = arith.addf %206, %205 : vector<2x64xf32>
    %208 = arith.divf %206, %207 : vector<2x64xf32>
    %209 = vector.extract_strided_slice %197 {offsets = [0, 64], sizes = [2, 64], strides = [1, 1]} : vector<2x192xf32> to vector<2x64xf32>
    %210 = vector.extract_strided_slice %200 {offsets = [0, 64], sizes = [2, 64], strides = [1, 1]} : vector<2x192xf32> to vector<2x64xf32>
    %211 = arith.addf %209, %210 : vector<2x64xf32>
    %212 = arith.negf %211 : vector<2x64xf32>
    %213 = math.exp %212 : vector<2x64xf32>
    %cst_50 = arith.constant 1.000000e+00 : f32
    %214 = vector.broadcast %cst_50 : f32 to vector<2x64xf32>
    %215 = arith.addf %214, %213 : vector<2x64xf32>
    %216 = arith.divf %214, %215 : vector<2x64xf32>
    %217 = vector.extract_strided_slice %197 {offsets = [0, 128], sizes = [2, 64], strides = [1, 1]} : vector<2x192xf32> to vector<2x64xf32>
    %218 = vector.extract_strided_slice %200 {offsets = [0, 128], sizes = [2, 64], strides = [1, 1]} : vector<2x192xf32> to vector<2x64xf32>
    %219 = arith.mulf %208, %218 : vector<2x64xf32>
    %220 = arith.addf %217, %219 : vector<2x64xf32>
    %221 = math.tanh %220 : vector<2x64xf32>
    %cst_51 = arith.constant 1.000000e+00 : f32
    %222 = vector.broadcast %cst_51 : f32 to vector<2x64xf32>
    %223 = arith.subf %222, %216 : vector<2x64xf32>
    %224 = arith.mulf %223, %221 : vector<2x64xf32>
    %225 = arith.mulf %216, %196 : vector<2x64xf32>
    %226 = arith.addf %224, %225 : vector<2x64xf32>
    %227 = vector.extract_strided_slice %45 {offsets = [12, 0], sizes = [2, 192], strides = [1, 1]} : vector<16x192xf32> to vector<2x192xf32>
    %cst_52 = arith.constant dense<0.000000e+00> : vector<2x192xf32>
    %228 = tpu.matmul %226, %40, %cst_52 {dimension_numbers = #tpu.dot_dimension_numbers<[1], [0], [0], [1], [0, 0, 1, 1], [], []>} : vector<2x64xf32>, vector<64x192xf32>, vector<2x192xf32> -> vector<2x192xf32>
    %229 = vector.broadcast %42 : vector<1x192xf32> to vector<2x192xf32>
    %230 = arith.addf %228, %229 : vector<2x192xf32>
    %231 = vector.extract_strided_slice %227 {offsets = [0, 0], sizes = [2, 64], strides = [1, 1]} : vector<2x192xf32> to vector<2x64xf32>
    %232 = vector.extract_strided_slice %230 {offsets = [0, 0], sizes = [2, 64], strides = [1, 1]} : vector<2x192xf32> to vector<2x64xf32>
    %233 = arith.addf %231, %232 : vector<2x64xf32>
    %234 = arith.negf %233 : vector<2x64xf32>
    %235 = math.exp %234 : vector<2x64xf32>
    %cst_53 = arith.constant 1.000000e+00 : f32
    %236 = vector.broadcast %cst_53 : f32 to vector<2x64xf32>
    %237 = arith.addf %236, %235 : vector<2x64xf32>
    %238 = arith.divf %236, %237 : vector<2x64xf32>
    %239 = vector.extract_strided_slice %227 {offsets = [0, 64], sizes = [2, 64], strides = [1, 1]} : vector<2x192xf32> to vector<2x64xf32>
    %240 = vector.extract_strided_slice %230 {offsets = [0, 64], sizes = [2, 64], strides = [1, 1]} : vector<2x192xf32> to vector<2x64xf32>
    %241 = arith.addf %239, %240 : vector<2x64xf32>
    %242 = arith.negf %241 : vector<2x64xf32>
    %243 = math.exp %242 : vector<2x64xf32>
    %cst_54 = arith.constant 1.000000e+00 : f32
    %244 = vector.broadcast %cst_54 : f32 to vector<2x64xf32>
    %245 = arith.addf %244, %243 : vector<2x64xf32>
    %246 = arith.divf %244, %245 : vector<2x64xf32>
    %247 = vector.extract_strided_slice %227 {offsets = [0, 128], sizes = [2, 64], strides = [1, 1]} : vector<2x192xf32> to vector<2x64xf32>
    %248 = vector.extract_strided_slice %230 {offsets = [0, 128], sizes = [2, 64], strides = [1, 1]} : vector<2x192xf32> to vector<2x64xf32>
    %249 = arith.mulf %238, %248 : vector<2x64xf32>
    %250 = arith.addf %247, %249 : vector<2x64xf32>
    %251 = math.tanh %250 : vector<2x64xf32>
    %cst_55 = arith.constant 1.000000e+00 : f32
    %252 = vector.broadcast %cst_55 : f32 to vector<2x64xf32>
    %253 = arith.subf %252, %246 : vector<2x64xf32>
    %254 = arith.mulf %253, %251 : vector<2x64xf32>
    %255 = arith.mulf %246, %226 : vector<2x64xf32>
    %256 = arith.addf %254, %255 : vector<2x64xf32>
    %257 = vector.extract_strided_slice %45 {offsets = [14, 0], sizes = [2, 192], strides = [1, 1]} : vector<16x192xf32> to vector<2x192xf32>
    %cst_56 = arith.constant dense<0.000000e+00> : vector<2x192xf32>
    %258 = tpu.matmul %256, %40, %cst_56 {dimension_numbers = #tpu.dot_dimension_numbers<[1], [0], [0], [1], [0, 0, 1, 1], [], []>} : vector<2x64xf32>, vector<64x192xf32>, vector<2x192xf32> -> vector<2x192xf32>
    %259 = vector.broadcast %42 : vector<1x192xf32> to vector<2x192xf32>
    %260 = arith.addf %258, %259 : vector<2x192xf32>
    %261 = vector.extract_strided_slice %257 {offsets = [0, 0], sizes = [2, 64], strides = [1, 1]} : vector<2x192xf32> to vector<2x64xf32>
    %262 = vector.extract_strided_slice %260 {offsets = [0, 0], sizes = [2, 64], strides = [1, 1]} : vector<2x192xf32> to vector<2x64xf32>
    %263 = arith.addf %261, %262 : vector<2x64xf32>
    %264 = arith.negf %263 : vector<2x64xf32>
    %265 = math.exp %264 : vector<2x64xf32>
    %cst_57 = arith.constant 1.000000e+00 : f32
    %266 = vector.broadcast %cst_57 : f32 to vector<2x64xf32>
    %267 = arith.addf %266, %265 : vector<2x64xf32>
    %268 = arith.divf %266, %267 : vector<2x64xf32>
    %269 = vector.extract_strided_slice %257 {offsets = [0, 64], sizes = [2, 64], strides = [1, 1]} : vector<2x192xf32> to vector<2x64xf32>
    %270 = vector.extract_strided_slice %260 {offsets = [0, 64], sizes = [2, 64], strides = [1, 1]} : vector<2x192xf32> to vector<2x64xf32>
    %271 = arith.addf %269, %270 : vector<2x64xf32>
    %272 = arith.negf %271 : vector<2x64xf32>
    %273 = math.exp %272 : vector<2x64xf32>
    %cst_58 = arith.constant 1.000000e+00 : f32
    %274 = vector.broadcast %cst_58 : f32 to vector<2x64xf32>
    %275 = arith.addf %274, %273 : vector<2x64xf32>
    %276 = arith.divf %274, %275 : vector<2x64xf32>
    %277 = vector.extract_strided_slice %257 {offsets = [0, 128], sizes = [2, 64], strides = [1, 1]} : vector<2x192xf32> to vector<2x64xf32>
    %278 = vector.extract_strided_slice %260 {offsets = [0, 128], sizes = [2, 64], strides = [1, 1]} : vector<2x192xf32> to vector<2x64xf32>
    %279 = arith.mulf %268, %278 : vector<2x64xf32>
    %280 = arith.addf %277, %279 : vector<2x64xf32>
    %281 = math.tanh %280 : vector<2x64xf32>
    %cst_59 = arith.constant 1.000000e+00 : f32
    %282 = vector.broadcast %cst_59 : f32 to vector<2x64xf32>
    %283 = arith.subf %282, %276 : vector<2x64xf32>
    %284 = arith.mulf %283, %281 : vector<2x64xf32>
    %285 = arith.mulf %276, %256 : vector<2x64xf32>
    %286 = arith.addf %284, %285 : vector<2x64xf32>
    %c120 = arith.constant 120 : index
    %c0_60 = arith.constant 0 : index
    %287 = vector.load %arg1[%c120, %c0_60] : memref<200x128xf32, #tpu.memory_space<vmem>>, vector<64x128xf32>
    %c194 = arith.constant 194 : index
    %c0_61 = arith.constant 0 : index
    %288 = vector.load %arg1[%c194, %c0_61] : memref<200x128xf32, #tpu.memory_space<vmem>>, vector<1x128xf32>
    %cst_62 = arith.constant dense<0.000000e+00> : vector<2x128xf32>
    %289 = tpu.matmul %286, %287, %cst_62 {dimension_numbers = #tpu.dot_dimension_numbers<[1], [0], [0], [1], [0, 0, 1, 1], [], []>} : vector<2x64xf32>, vector<64x128xf32>, vector<2x128xf32> -> vector<2x128xf32>
    %290 = vector.broadcast %288 : vector<1x128xf32> to vector<2x128xf32>
    %291 = arith.addf %289, %290 : vector<2x128xf32>
    %cst_63 = arith.constant 0.000000e+00 : f32
    %292 = vector.broadcast %cst_63 : f32 to vector<2x128xf32>
    %293 = arith.maximumf %291, %292 : vector<2x128xf32>
    %c184 = arith.constant 184 : index
    %c0_64 = arith.constant 0 : index
    %294 = vector.load %arg1[%c184, %c0_64] : memref<200x128xf32, #tpu.memory_space<vmem>>, vector<8x128xf32>
    %c195 = arith.constant 195 : index
    %c0_65 = arith.constant 0 : index
    %295 = vector.load %arg1[%c195, %c0_65] : memref<200x128xf32, #tpu.memory_space<vmem>>, vector<1x8xf32>
    %cst_66 = arith.constant dense<0.000000e+00> : vector<2x8xf32>
    %296 = tpu.matmul %293, %294, %cst_66 {dimension_numbers = #tpu.dot_dimension_numbers<[1], [1], [0], [0], [0, 0, 1, 0], [], []>} : vector<2x128xf32>, vector<8x128xf32>, vector<2x8xf32> -> vector<2x8xf32>
    %297 = vector.broadcast %295 : vector<1x8xf32> to vector<2x8xf32>
    %298 = arith.addf %296, %297 : vector<2x8xf32>
    %c0_67 = arith.constant 0 : index
    %c0_68 = arith.constant 0 : index
    %299 = vector.load %arg3[%c0_67, %c0_68] : memref<2x8xf32, #tpu.memory_space<vmem>>, vector<2x8xf32>
    tpu.vector_store %arg3[%c0_67, %c0_68], %298 {strides = array<i32>} : memref<2x8xf32, #tpu.memory_space<vmem>>, vector<2x8xf32>,
    return
  }
}

</mosaic_0001>

<llo_original>
// kernel: a3c_forward.1
$region0: #{a3c_forward.1}
  #allocation0 [shape = 'u32[]', space=smem, size = 0x4, offset = 0x4, fixed_abs, tag = 'smem constant byte address 0x4 - core index']
  #allocation1 [shape = 'u32[144,128]{1,0:T(1,128)}', space=vmem, size = 0x12000, scoped, tag = 'internal scratch']
  %s0 = inlined_call_operand.vmem [shape: f32[16,4], index: 0, kind: input, shape index: {}]
  %s1 = inlined_call_operand.hbm [shape: f32[200,128], index: 1, kind: input, shape index: {}]
  %s2 = inlined_call_operand.hbm [shape: f32[136,192], index: 2, kind: input, shape index: {}]
  %s3 = inlined_call_operand.vmem [shape: f32[2,8], index: 3, kind: output, shape index: {}]
  %s4 = sld [smem:[#allocation0]]
  $region30: #{a3c_forward.1} parent=0
    _
  %s6 = ssub.s32 1, %s4
  %s7 = scalar_select 0, %s6, %s4
  $region1: #{a3c_forward.1} parent=0
    #allocation2 [shape = 'u8[102400]{0}', space=vmem, size = 0x19000, scoped, tag = 'input window, operand 1, single buffered']
    #allocation3 [shape = 's32[1]{0}', space=sflag, size = 0x4, scoped, tag = 'scoped memory for a3c_forward.1']
    #allocation4 [shape = 'u8[139264]{0}', space=vmem, size = 0x22000, scoped, tag = 'input window, operand 2, single buffered']
    #allocation5 [shape = 's32[1]{0}', space=sflag, size = 0x4, scoped, tag = 'scoped memory for a3c_forward.1']
    %8 = vsyncpa [#allocation3], 0
    %9 = vsyncpa [#allocation5], 0
    // Predicated region
    $region2: #{a3c_forward.1} parent=1 // pred_check
      _
    $region3: #{a3c_forward.1} parent=1 // pred_check_branch
      %11 = sbr.rel (0) target = $region5
    $region4: #{a3c_forward.1} parent=1 // pred_region
      _
    $region5: #{a3c_forward.1} parent=1 // pred_fallthru
      _
    // Predicated region
    $region6: #{a3c_forward.1} parent=1 // pred_check
      _
    $region7: #{a3c_forward.1} parent=1 // pred_check_branch
      %13 = sbr.rel (0) target = $region9
    $region8: #{a3c_forward.1} parent=1 // pred_region
      %s15 = ssub.s32 3200, 3200
      %16 = vsyncadd [#allocation3], %s15
      %s17 = sshll.u32 [#allocation2], 4
      %s18 = int_to_ptr.vmem [resolvable:$true] %s17
      %23 = dma.hbm_to_vmem [thread:$0]  %s1, 3200, %s18, [#allocation3], 128, 128, 8
    $region9: #{a3c_forward.1} parent=1 // pred_fallthru
      _
    // Predicated region
    $region10: #{a3c_forward.1} parent=1 // pred_check
      _
    $region11: #{a3c_forward.1} parent=1 // pred_check_branch
      %25 = sbr.rel (0) target = $region13
    $region12: #{a3c_forward.1} parent=1 // pred_region
      %s27 = ssub.s32 4352, 4352
      %28 = vsyncadd [#allocation5], %s27
      %s29 = sshll.u32 [#allocation4], 4
      %s30 = int_to_ptr.vmem [resolvable:$true] %s29
      %35 = dma.hbm_to_vmem [thread:$0]  %s2, 4352, %s30, [#allocation5], 256, 256, 16
    $region13: #{a3c_forward.1} parent=1 // pred_fallthru
      _
    // Predicated region
    $region14: #{a3c_forward.1} parent=1 // pred_check
      _
    $region15: #{a3c_forward.1} parent=1 // pred_check_branch
      %37 = sbr.rel (0) target = $region17
    $region16: #{a3c_forward.1} parent=1 // pred_region
      %38 = dma.done [#allocation3], 3200
    $region17: #{a3c_forward.1} parent=1 // pred_fallthru
      _
    // Predicated region
    $region18: #{a3c_forward.1} parent=1 // pred_check
      _
    $region19: #{a3c_forward.1} parent=1 // pred_check_branch
      %40 = sbr.rel (0) target = $region21
    $region20: #{a3c_forward.1} parent=1 // pred_region
      %41 = dma.done [#allocation5], 4352
    $region21: #{a3c_forward.1} parent=1 // pred_fallthru
      _
    %v42 = vld [vmem:[%s0] sm:$0xff]
    %v43 = vld [vmem:[%s0 + $0x8] sm:$0xff]
    %v44 = vld [vmem:[#allocation2] sm:$0xf]
    %v45 = vld [vmem:[#allocation2 + $0x8] sm:$0xf]
    %v46 = vld [vmem:[#allocation2 + $0x10] sm:$0xf]
    %v47 = vld [vmem:[#allocation2 + $0xc0] sm:$0x1]
    %v48 = vlaneseq
    %v49 = vshrl.u32 %v48, 7
    %v50 = vsub.s32 0, %v49
    %v51 = vrot.slane %v47, %v50
    %vm52 = vcmask 31744
    %v54 = vsel %vm52, %v42, 0
    %v57 = vsel %vm52, %v43, 0
    %vm59 = vcmask 1043456
    %v61 = vsel %vm59, %v45, 0
    %63 = vmatprep.subr.mxu0 0.0
    %64 = vmatpush1.msra.mxu0 %v61
    %65 = vmatprep.subr.mxu0 0.0
    %66 = vmatpush1.msra.mxu0 0.0
    %67 = vmatprep.subr.mxu0 0.0
    %68 = vmatpush1.msra.mxu0 0.0
    %69 = vmatprep.subr.mxu0 0.0
    %70 = vmatpush1.msra.mxu0 0.0
    %71 = vmatprep.subr.mxu0 0.0
    %72 = vmatpush1.msra.mxu0 0.0
    %73 = vmatprep.subr.mxu0 0.0
    %74 = vmatpush1.msra.mxu0 0.0
    %75 = vmatprep.subr.mxu0 0.0
    %76 = vmatpush1.msra.mxu0 0.0
    %77 = vmatprep.subr.mxu0 0.0
    %78 = vmatpush1.msra.mxu0 0.0
    %79 = vmatprep.subr.mxu0 0.0
    %80 = vmatpush1.msra.mxu0 0.0
    %81 = vmatprep.subr.mxu0 0.0
    %82 = vmatpush1.msra.mxu0 0.0
    %83 = vmatprep.subr.mxu0 0.0
    %84 = vmatpush1.msra.mxu0 0.0
    %85 = vmatprep.subr.mxu0 0.0
    %86 = vmatpush1.msra.mxu0 0.0
    %87 = vmatprep.subr.mxu0 0.0
    %88 = vmatpush1.msra.mxu0 0.0
    %89 = vmatprep.subr.mxu0 0.0
    %90 = vmatpush1.msra.mxu0 0.0
    %91 = vmatprep.subr.mxu0 0.0
    %92 = vmatpush1.msra.mxu0 0.0
    %93 = vmatprep.subr.mxu0 0.0
    %94 = vmatpush1.msra.mxu0 0.0
    %95 = vmatprep.subr.mxu0 0.0
    %96 = vmatpush1.msra.mxu0 0.0
    %97 = vmatprep.subr.mxu0 0.0
    %98 = vmatpush1.msra.mxu0 0.0
    %99 = vmatprep.subr.mxu0 0.0
    %100 = vmatpush1.msra.mxu0 0.0
    %101 = vmatprep.subr.mxu0 0.0
    %102 = vmatpush1.msra.mxu0 0.0
    %103 = vmatprep.subr.mxu0 0.0
    %104 = vmatpush1.msra.mxu0 0.0
    %105 = vmatprep.subr.mxu0 0.0
    %106 = vmatpush1.msra.mxu0 0.0
    %107 = vmatprep.subr.mxu0 0.0
    %108 = vmatpush1.msra.mxu0 0.0
    %109 = vmatprep.subr.mxu0 0.0
    %110 = vmatpush1.msra.mxu0 0.0
    %111 = vmatprep.subr.mxu0 0.0
    %112 = vmatpush1.msra.mxu0 0.0
    %113 = vmatprep.subr.mxu0 0.0
    %114 = vmatpush1.msra.mxu0 0.0
    %115 = vmatprep.subr.mxu0 0.0
    %116 = vmatpush1.msra.mxu0 0.0
    %117 = vmatprep.subr.mxu0 0.0
    %118 = vmatpush1.msra.mxu0 0.0
    %119 = vmatprep.subr.mxu0 0.0
    %120 = vmatpush1.msra.mxu0 0.0
    %121 = vmatprep.subr.mxu0 0.0
    %122 = vmatpush1.msra.mxu0 0.0
    %123 = vmatprep.subr.mxu0 0.0
    %124 = vmatpush1.msra.mxu0 0.0
    %125 = vmatprep.subr.mxu0 0.0
    %126 = vmatpush1.msra.mxu0 0.0
    %127 = vmatprep.mubr.f32.mxu0 0.0
    %128 = vmatmul.mubr.f32.gmra.mrb[0].mxu0 %v54
    %v129 = vpop.f32.mrb[0].mxu0
    %v130 = vadd.f32 %v51, %v129
    %v131 = vpop.f32.mrb[0].mxu0
    %132 = vmatprep.mubr.f32.mxu0 0.0
    %133 = vmatmul.mubr.f32.gmra.mrb[0].mxu0 %v57
    %v134 = vpop.f32.mrb[0].mxu0
    %v135 = vadd.f32 %v51, %v134
    %v136 = vpop.f32.mrb[0].mxu0
    %137 = vdwg.mxu0
    %v139 = vsel %vm59, %v44, 0
    %141 = vmatprep.subr.mxu0 0.0
    %142 = vmatpush1.msra.mxu0 %v139
    %143 = vmatprep.subr.mxu0 0.0
    %144 = vmatpush1.msra.mxu0 0.0
    %145 = vmatprep.subr.mxu0 0.0
    %146 = vmatpush1.msra.mxu0 0.0
    %147 = vmatprep.subr.mxu0 0.0
    %148 = vmatpush1.msra.mxu0 0.0
    %149 = vmatprep.subr.mxu0 0.0
    %150 = vmatpush1.msra.mxu0 0.0
    %151 = vmatprep.subr.mxu0 0.0
    %152 = vmatpush1.msra.mxu0 0.0
    %153 = vmatprep.subr.mxu0 0.0
    %154 = vmatpush1.msra.mxu0 0.0
    %155 = vmatprep.subr.mxu0 0.0
    %156 = vmatpush1.msra.mxu0 0.0
    %157 = vmatprep.subr.mxu0 0.0
    %158 = vmatpush1.msra.mxu0 0.0
    %159 = vmatprep.subr.mxu0 0.0
    %160 = vmatpush1.msra.mxu0 0.0
    %161 = vmatprep.subr.mxu0 0.0
    %162 = vmatpush1.msra.mxu0 0.0
    %163 = vmatprep.subr.mxu0 0.0
    %164 = vmatpush1.msra.mxu0 0.0
    %165 = vmatprep.subr.mxu0 0.0
    %166 = vmatpush1.msra.mxu0 0.0
    %167 = vmatprep.subr.mxu0 0.0
    %168 = vmatpush1.msra.mxu0 0.0
    %169 = vmatprep.subr.mxu0 0.0
    %170 = vmatpush1.msra.mxu0 0.0
    %171 = vmatprep.subr.mxu0 0.0
    %172 = vmatpush1.msra.mxu0 0.0
    %173 = vmatprep.subr.mxu0 0.0
    %174 = vmatpush1.msra.mxu0 0.0
    %175 = vmatprep.subr.mxu0 0.0
    %176 = vmatpush1.msra.mxu0 0.0
    %177 = vmatprep.subr.mxu0 0.0
    %178 = vmatpush1.msra.mxu0 0.0
    %179 = vmatprep.subr.mxu0 0.0
    %180 = vmatpush1.msra.mxu0 0.0
    %181 = vmatprep.subr.mxu0 0.0
    %182 = vmatpush1.msra.mxu0 0.0
    %183 = vmatprep.subr.mxu0 0.0
    %184 = vmatpush1.msra.mxu0 0.0
    %185 = vmatprep.subr.mxu0 0.0
    %186 = vmatpush1.msra.mxu0 0.0
    %187 = vmatprep.subr.mxu0 0.0
    %188 = vmatpush1.msra.mxu0 0.0
    %189 = vmatprep.subr.mxu0 0.0
    %190 = vmatpush1.msra.mxu0 0.0
    %191 = vmatprep.subr.mxu0 0.0
    %192 = vmatpush1.msra.mxu0 0.0
    %193 = vmatprep.subr.mxu0 0.0
    %194 = vmatpush1.msra.mxu0 0.0
    %195 = vmatprep.subr.mxu0 0.0
    %196 = vmatpush1.msra.mxu0 0.0
    %197 = vmatprep.subr.mxu0 0.0
    %198 = vmatpush1.msra.mxu0 0.0
    %199 = vmatprep.subr.mxu0 0.0
    %200 = vmatpush1.msra.mxu0 0.0
    %201 = vmatprep.subr.mxu0 0.0
    %202 = vmatpush1.msra.mxu0 0.0
    %203 = vmatprep.subr.mxu0 0.0
    %204 = vmatpush1.msra.mxu0 0.0
    %205 = vmatprep.mubr.f32.mxu0 0.0
    %206 = vmatmul.mubr.f32.gmra.mrb[0].mxu0 %v54
    %v207 = vpop.f32.mrb[0].mxu0
    %v208 = vadd.f32 0.0, %v207
    %v209 = vpop.f32.mrb[0].mxu0
    %210 = vmatprep.mubr.f32.mxu0 0.0
    %211 = vmatmul.mubr.f32.gmra.mrb[0].mxu0 %v57
    %v212 = vpop.f32.mrb[0].mxu0
    %v213 = vadd.f32 0.0, %v212
    %v214 = vpop.f32.mrb[0].mxu0
    %215 = vdwg.mxu0
    %vm218 = vcmask 1041408
    %v219 = vrot.slane %v208, 6
    %v220 = vrot.slane %v213, 6
    %v221 = vsel %vm218, %v219, %v220
    %v224 = vsel %vm218, 0.0, %v219
    %v225 = vadd.f32 %v130, %v224
    %v226 = vadd.f32 %v135, %v221
    %v228 = vsel %vm59, %v46, 0
    %230 = vmatprep.subr.mxu0 0.0
    %231 = vmatpush1.msra.mxu0 %v228
    %232 = vmatprep.subr.mxu0 0.0
    %233 = vmatpush1.msra.mxu0 0.0
    %234 = vmatprep.subr.mxu0 0.0
    %235 = vmatpush1.msra.mxu0 0.0
    %236 = vmatprep.subr.mxu0 0.0
    %237 = vmatpush1.msra.mxu0 0.0
    %238 = vmatprep.subr.mxu0 0.0
    %239 = vmatpush1.msra.mxu0 0.0
    %240 = vmatprep.subr.mxu0 0.0
    %241 = vmatpush1.msra.mxu0 0.0
    %242 = vmatprep.subr.mxu0 0.0
    %243 = vmatpush1.msra.mxu0 0.0
    %244 = vmatprep.subr.mxu0 0.0
    %245 = vmatpush1.msra.mxu0 0.0
    %246 = vmatprep.subr.mxu0 0.0
    %247 = vmatpush1.msra.mxu0 0.0
    %248 = vmatprep.subr.mxu0 0.0
    %249 = vmatpush1.msra.mxu0 0.0
    %250 = vmatprep.subr.mxu0 0.0
    %251 = vmatpush1.msra.mxu0 0.0
    %252 = vmatprep.subr.mxu0 0.0
    %253 = vmatpush1.msra.mxu0 0.0
    %254 = vmatprep.subr.mxu0 0.0
    %255 = vmatpush1.msra.mxu0 0.0
    %256 = vmatprep.subr.mxu0 0.0
    %257 = vmatpush1.msra.mxu0 0.0
    %258 = vmatprep.subr.mxu0 0.0
    %259 = vmatpush1.msra.mxu0 0.0
    %260 = vmatprep.subr.mxu0 0.0
    %261 = vmatpush1.msra.mxu0 0.0
    %262 = vmatprep.subr.mxu0 0.0
    %263 = vmatpush1.msra.mxu0 0.0
    %264 = vmatprep.subr.mxu0 0.0
    %265 = vmatpush1.msra.mxu0 0.0
    %266 = vmatprep.subr.mxu0 0.0
    %267 = vmatpush1.msra.mxu0 0.0
    %268 = vmatprep.subr.mxu0 0.0
    %269 = vmatpush1.msra.mxu0 0.0
    %270 = vmatprep.subr.mxu0 0.0
    %271 = vmatpush1.msra.mxu0 0.0
    %272 = vmatprep.subr.mxu0 0.0
    %273 = vmatpush1.msra.mxu0 0.0
    %274 = vmatprep.subr.mxu0 0.0
    %275 = vmatpush1.msra.mxu0 0.0
    %276 = vmatprep.subr.mxu0 0.0
    %277 = vmatpush1.msra.mxu0 0.0
    %278 = vmatprep.subr.mxu0 0.0
    %279 = vmatpush1.msra.mxu0 0.0
    %280 = vmatprep.subr.mxu0 0.0
    %281 = vmatpush1.msra.mxu0 0.0
    %282 = vmatprep.subr.mxu0 0.0
    %283 = vmatpush1.msra.mxu0 0.0
    %284 = vmatprep.subr.mxu0 0.0
    %285 = vmatpush1.msra.mxu0 0.0
    %286 = vmatprep.subr.mxu0 0.0
    %287 = vmatpush1.msra.mxu0 0.0
    %288 = vmatprep.subr.mxu0 0.0
    %289 = vmatpush1.msra.mxu0 0.0
    %290 = vmatprep.subr.mxu0 0.0
    %291 = vmatpush1.msra.mxu0 0.0
    %292 = vmatprep.subr.mxu0 0.0
    %293 = vmatpush1.msra.mxu0 0.0
    %294 = vmatprep.mubr.f32.mxu0 0.0
    %295 = vmatmul.mubr.f32.gmra.mrb[0].mxu0 %v54
    %v296 = vpop.f32.mrb[0].mxu0
    %v297 = vadd.f32 0.0, %v296
    %v298 = vpop.f32.mrb[0].mxu0
    %299 = vmatprep.mubr.f32.mxu0 0.0
    %300 = vmatmul.mubr.f32.gmra.mrb[0].mxu0 %v57
    %v301 = vpop.f32.mrb[0].mxu0
    %v302 = vadd.f32 0.0, %v301
    %v303 = vpop.f32.mrb[0].mxu0
    %304 = vdwg.mxu0
    %vm307 = vcmask 1045504
    %v308 = vrot.slane %v297, 2
    %v309 = vrot.slane %v302, 2
    %v310 = vsel %vm307, %v308, %v309
    %v313 = vsel %vm307, %v309, 0.0
    %v314 = vadd.f32 %v225, %v310
    %v315 = vadd.f32 %v226, %v313
    %v316 = vmax.f32 %v314, 0.0
    %v317 = vmax.f32 %v315, 0.0
    %v318 = vld [vmem:[#allocation2 + $0x18] sm:$0xff]
    %v319 = vld [vmem:[#allocation2 + $0x20] sm:$0xff]
    %v320 = vld [vmem:[#allocation2 + $0x28] sm:$0xff]
    %v321 = vld [vmem:[#allocation2 + $0x30] sm:$0xff]
    %v322 = vld [vmem:[#allocation2 + $0x38] sm:$0xff]
    %v323 = vld [vmem:[#allocation2 + $0x40] sm:$0xff]
    %v324 = vld [vmem:[#allocation2 + $0x48] sm:$0xff]
    %v325 = vld [vmem:[#allocation2 + $0x50] sm:$0xff]
    %v326 = vld [vmem:[#allocation2 + $0x58] sm:$0xff]
    %v327 = vld [vmem:[#allocation2 + $0x60] sm:$0xff]
    %v328 = vld [vmem:[#allocation2 + $0x68] sm:$0xff]
    %v329 = vld [vmem:[#allocation2 + $0x70] sm:$0xff]
    %v330 = vld [vmem:[#allocation2 + $0xc1] sm:$0x1]
    %v331 = vlaneseq
    %v332 = vshrl.u32 %v331, 7
    %v333 = vsub.s32 0, %v332
    %v334 = vrot.slane %v330, %v333
    %vm335 = vcmask 261120
    %v337 = vsel %vm335, %v316, 0
    %v340 = vsel %vm335, %v317, 0
    %342 = vmatprep.subr.mxu0 0.0
    %343 = vmatpush1.msra.mxu0 %v322
    %344 = vmatprep.subr.mxu0 0.0
    %345 = vmatpush1.msra.mxu0 %v323
    %346 = vmatprep.subr.mxu0 0.0
    %347 = vmatpush1.msra.mxu0 %v324
    %348 = vmatprep.subr.mxu0 0.0
    %349 = vmatpush1.msra.mxu0 %v325
    %350 = vmatprep.subr.mxu0 0.0
    %351 = vmatpush1.msra.mxu0 0.0
    %352 = vmatprep.subr.mxu0 0.0
    %353 = vmatpush1.msra.mxu0 0.0
    %354 = vmatprep.subr.mxu0 0.0
    %355 = vmatpush1.msra.mxu0 0.0
    %356 = vmatprep.subr.mxu0 0.0
    %357 = vmatpush1.msra.mxu0 0.0
    %358 = vmatprep.subr.mxu0 0.0
    %359 = vmatpush1.msra.mxu0 0.0
    %360 = vmatprep.subr.mxu0 0.0
    %361 = vmatpush1.msra.mxu0 0.0
    %362 = vmatprep.subr.mxu0 0.0
    %363 = vmatpush1.msra.mxu0 0.0
    %364 = vmatprep.subr.mxu0 0.0
    %365 = vmatpush1.msra.mxu0 0.0
    %366 = vmatprep.subr.mxu0 0.0
    %367 = vmatpush1.msra.mxu0 0.0
    %368 = vmatprep.subr.mxu0 0.0
    %369 = vmatpush1.msra.mxu0 0.0
    %370 = vmatprep.subr.mxu0 0.0
    %371 = vmatpush1.msra.mxu0 0.0
    %372 = vmatprep.subr.mxu0 0.0
    %373 = vmatpush1.msra.mxu0 0.0
    %374 = vmatprep.subr.mxu0 0.0
    %375 = vmatpush1.msra.mxu0 0.0
    %376 = vmatprep.subr.mxu0 0.0
    %377 = vmatpush1.msra.mxu0 0.0
    %378 = vmatprep.subr.mxu0 0.0
    %379 = vmatpush1.msra.mxu0 0.0
    %380 = vmatprep.subr.mxu0 0.0
    %381 = vmatpush1.msra.mxu0 0.0
    %382 = vmatprep.subr.mxu0 0.0
    %383 = vmatpush1.msra.mxu0 0.0
    %384 = vmatprep.subr.mxu0 0.0
    %385 = vmatpush1.msra.mxu0 0.0
    %386 = vmatprep.subr.mxu0 0.0
    %387 = vmatpush1.msra.mxu0 0.0
    %388 = vmatprep.subr.mxu0 0.0
    %389 = vmatpush1.msra.mxu0 0.0
    %390 = vmatprep.subr.mxu0 0.0
    %391 = vmatpush1.msra.mxu0 0.0
    %392 = vmatprep.subr.mxu0 0.0
    %393 = vmatpush1.msra.mxu0 0.0
    %394 = vmatprep.subr.mxu0 0.0
    %395 = vmatpush1.msra.mxu0 0.0
    %396 = vmatprep.subr.mxu0 0.0
    %397 = vmatpush1.msra.mxu0 0.0
    %398 = vmatprep.subr.mxu0 0.0
    %399 = vmatpush1.msra.mxu0 0.0
    %400 = vmatprep.subr.mxu0 0.0
    %401 = vmatpush1.msra.mxu0 0.0
    %402 = vmatprep.subr.mxu0 0.0
    %403 = vmatpush1.msra.mxu0 0.0
    %404 = vmatprep.subr.mxu0 0.0
    %405 = vmatpush1.msra.mxu0 0.0
    %406 = vmatprep.mubr.f32.mxu0 0.0
    %407 = vmatmul.mubr.f32.gmra.mrb[0].mxu0 %v337
    %v408 = vpop.f32.mrb[0].mxu0
    %v409 = vadd.f32 %v334, %v408
    %v410 = vpop.f32.mrb[0].mxu0
    %411 = vmatprep.mubr.f32.mxu0 0.0
    %412 = vmatmul.mubr.f32.gmra.mrb[0].mxu0 %v340
    %v413 = vpop.f32.mrb[0].mxu0
    %v414 = vadd.f32 %v334, %v413
    %v415 = vpop.f32.mrb[0].mxu0
    %416 = vdwg.mxu0
    %417 = vmatprep.subr.mxu0 0.0
    %418 = vmatpush1.msra.mxu0 %v318
    %419 = vmatprep.subr.mxu0 0.0
    %420 = vmatpush1.msra.mxu0 %v319
    %421 = vmatprep.subr.mxu0 0.0
    %422 = vmatpush1.msra.mxu0 %v320
    %423 = vmatprep.subr.mxu0 0.0
    %424 = vmatpush1.msra.mxu0 %v321
    %425 = vmatprep.subr.mxu0 0.0
    %426 = vmatpush1.msra.mxu0 0.0
    %427 = vmatprep.subr.mxu0 0.0
    %428 = vmatpush1.msra.mxu0 0.0
    %429 = vmatprep.subr.mxu0 0.0
    %430 = vmatpush1.msra.mxu0 0.0
    %431 = vmatprep.subr.mxu0 0.0
    %432 = vmatpush1.msra.mxu0 0.0
    %433 = vmatprep.subr.mxu0 0.0
    %434 = vmatpush1.msra.mxu0 0.0
    %435 = vmatprep.subr.mxu0 0.0
    %436 = vmatpush1.msra.mxu0 0.0
    %437 = vmatprep.subr.mxu0 0.0
    %438 = vmatpush1.msra.mxu0 0.0
    %439 = vmatprep.subr.mxu0 0.0
    %440 = vmatpush1.msra.mxu0 0.0
    %441 = vmatprep.subr.mxu0 0.0
    %442 = vmatpush1.msra.mxu0 0.0
    %443 = vmatprep.subr.mxu0 0.0
    %444 = vmatpush1.msra.mxu0 0.0
    %445 = vmatprep.subr.mxu0 0.0
    %446 = vmatpush1.msra.mxu0 0.0
    %447 = vmatprep.subr.mxu0 0.0
    %448 = vmatpush1.msra.mxu0 0.0
    %449 = vmatprep.subr.mxu0 0.0
    %450 = vmatpush1.msra.mxu0 0.0
    %451 = vmatprep.subr.mxu0 0.0
    %452 = vmatpush1.msra.mxu0 0.0
    %453 = vmatprep.subr.mxu0 0.0
    %454 = vmatpush1.msra.mxu0 0.0
    %455 = vmatprep.subr.mxu0 0.0
    %456 = vmatpush1.msra.mxu0 0.0
    %457 = vmatprep.subr.mxu0 0.0
    %458 = vmatpush1.msra.mxu0 0.0
    %459 = vmatprep.subr.mxu0 0.0
    %460 = vmatpush1.msra.mxu0 0.0
    %461 = vmatprep.subr.mxu0 0.0
    %462 = vmatpush1.msra.mxu0 0.0
    %463 = vmatprep.subr.mxu0 0.0
    %464 = vmatpush1.msra.mxu0 0.0
    %465 = vmatprep.subr.mxu0 0.0
    %466 = vmatpush1.msra.mxu0 0.0
    %467 = vmatprep.subr.mxu0 0.0
    %468 = vmatpush1.msra.mxu0 0.0
    %469 = vmatprep.subr.mxu0 0.0
    %470 = vmatpush1.msra.mxu0 0.0
    %471 = vmatprep.subr.mxu0 0.0
    %472 = vmatpush1.msra.mxu0 0.0
    %473 = vmatprep.subr.mxu0 0.0
    %474 = vmatpush1.msra.mxu0 0.0
    %475 = vmatprep.subr.mxu0 0.0
    %476 = vmatpush1.msra.mxu0 0.0
    %477 = vmatprep.subr.mxu0 0.0
    %478 = vmatpush1.msra.mxu0 0.0
    %479 = vmatprep.subr.mxu0 0.0
    %480 = vmatpush1.msra.mxu0 0.0
    %481 = vmatprep.mubr.f32.mxu0 0.0
    %482 = vmatmul.mubr.f32.gmra.mrb[0].mxu0 %v337
    %v483 = vpop.f32.mrb[0].mxu0
    %v484 = vadd.f32 0.0, %v483
    %v485 = vpop.f32.mrb[0].mxu0
    %486 = vmatprep.mubr.f32.mxu0 0.0
    %487 = vmatmul.mubr.f32.gmra.mrb[0].mxu0 %v340
    %v488 = vpop.f32.mrb[0].mxu0
    %v489 = vadd.f32 0.0, %v488
    %v490 = vpop.f32.mrb[0].mxu0
    %491 = vdwg.mxu0
    %v494 = vrot.slane %v484, 6
    %v495 = vrot.slane %v489, 6
    %v496 = vsel %vm218, %v494, %v495
    %v499 = vsel %vm218, 0.0, %v494
    %v500 = vadd.f32 %v409, %v499
    %v501 = vadd.f32 %v414, %v496
    %502 = vmatprep.subr.mxu0 0.0
    %503 = vmatpush1.msra.mxu0 %v326
    %504 = vmatprep.subr.mxu0 0.0
    %505 = vmatpush1.msra.mxu0 %v327
    %506 = vmatprep.subr.mxu0 0.0
    %507 = vmatpush1.msra.mxu0 %v328
    %508 = vmatprep.subr.mxu0 0.0
    %509 = vmatpush1.msra.mxu0 %v329
    %510 = vmatprep.subr.mxu0 0.0
    %511 = vmatpush1.msra.mxu0 0.0
    %512 = vmatprep.subr.mxu0 0.0
    %513 = vmatpush1.msra.mxu0 0.0
    %514 = vmatprep.subr.mxu0 0.0
    %515 = vmatpush1.msra.mxu0 0.0
    %516 = vmatprep.subr.mxu0 0.0
    %517 = vmatpush1.msra.mxu0 0.0
    %518 = vmatprep.subr.mxu0 0.0
    %519 = vmatpush1.msra.mxu0 0.0
    %520 = vmatprep.subr.mxu0 0.0
    %521 = vmatpush1.msra.mxu0 0.0
    %522 = vmatprep.subr.mxu0 0.0
    %523 = vmatpush1.msra.mxu0 0.0
    %524 = vmatprep.subr.mxu0 0.0
    %525 = vmatpush1.msra.mxu0 0.0
    %526 = vmatprep.subr.mxu0 0.0
    %527 = vmatpush1.msra.mxu0 0.0
    %528 = vmatprep.subr.mxu0 0.0
    %529 = vmatpush1.msra.mxu0 0.0
    %530 = vmatprep.subr.mxu0 0.0
    %531 = vmatpush1.msra.mxu0 0.0
    %532 = vmatprep.subr.mxu0 0.0
    %533 = vmatpush1.msra.mxu0 0.0
    %534 = vmatprep.subr.mxu0 0.0
    %535 = vmatpush1.msra.mxu0 0.0
    %536 = vmatprep.subr.mxu0 0.0
    %537 = vmatpush1.msra.mxu0 0.0
    %538 = vmatprep.subr.mxu0 0.0
    %539 = vmatpush1.msra.mxu0 0.0
    %540 = vmatprep.subr.mxu0 0.0
    %541 = vmatpush1.msra.mxu0 0.0
    %542 = vmatprep.subr.mxu0 0.0
    %543 = vmatpush1.msra.mxu0 0.0
    %544 = vmatprep.subr.mxu0 0.0
    %545 = vmatpush1.msra.mxu0 0.0
    %546 = vmatprep.subr.mxu0 0.0
    %547 = vmatpush1.msra.mxu0 0.0
    %548 = vmatprep.subr.mxu0 0.0
    %549 = vmatpush1.msra.mxu0 0.0
    %550 = vmatprep.subr.mxu0 0.0
    %551 = vmatpush1.msra.mxu0 0.0
    %552 = vmatprep.subr.mxu0 0.0
    %553 = vmatpush1.msra.mxu0 0.0
    %554 = vmatprep.subr.mxu0 0.0
    %555 = vmatpush1.msra.mxu0 0.0
    %556 = vmatprep.subr.mxu0 0.0
    %557 = vmatpush1.msra.mxu0 0.0
    %558 = vmatprep.subr.mxu0 0.0
    %559 = vmatpush1.msra.mxu0 0.0
    %560 = vmatprep.subr.mxu0 0.0
    %561 = vmatpush1.msra.mxu0 0.0
    %562 = vmatprep.subr.mxu0 0.0
    %563 = vmatpush1.msra.mxu0 0.0
    %564 = vmatprep.subr.mxu0 0.0
    %565 = vmatpush1.msra.mxu0 0.0
    %566 = vmatprep.mubr.f32.mxu0 0.0
    %567 = vmatmul.mubr.f32.gmra.mrb[0].mxu0 %v337
    %v568 = vpop.f32.mrb[0].mxu0
    %v569 = vadd.f32 0.0, %v568
    %v570 = vpop.f32.mrb[0].mxu0
    %571 = vmatprep.mubr.f32.mxu0 0.0
    %572 = vmatmul.mubr.f32.gmra.mrb[0].mxu0 %v340
    %v573 = vpop.f32.mrb[0].mxu0
    %v574 = vadd.f32 0.0, %v573
    %v575 = vpop.f32.mrb[0].mxu0
    %576 = vdwg.mxu0
    %v579 = vrot.slane %v569, 2
    %v580 = vrot.slane %v574, 2
    %v581 = vsel %vm307, %v579, %v580
    %v584 = vsel %vm307, %v580, 0.0
    %v585 = vadd.f32 %v500, %v581
    %v586 = vadd.f32 %v501, %v584
    %v587 = vmax.f32 %v585, 0.0
    %v588 = vmax.f32 %v586, 0.0
    %v589 = vld [vmem:[#allocation4] sm:$0xff]
    %v590 = vld [vmem:[#allocation4 + $0x8] sm:$0xff]
    %v591 = vld [vmem:[#allocation4 + $0x10] sm:$0xff]
    %v592 = vld [vmem:[#allocation4 + $0x18] sm:$0xff]
    %v593 = vld [vmem:[#allocation4 + $0x20] sm:$0xff]
    %v594 = vld [vmem:[#allocation4 + $0x28] sm:$0xff]
    %v595 = vld [vmem:[#allocation4 + $0x30] sm:$0xff]
    %v596 = vld [vmem:[#allocation4 + $0x38] sm:$0xff]
    %v597 = vld [vmem:[#allocation4 + $0x40] sm:$0xff]
    %v598 = vld [vmem:[#allocation4 + $0x48] sm:$0xff]
    %v599 = vld [vmem:[#allocation4 + $0x50] sm:$0xff]
    %v600 = vld [vmem:[#allocation4 + $0x58] sm:$0xff]
    %v601 = vld [vmem:[#allocation4 + $0x60] sm:$0xff]
    %v602 = vld [vmem:[#allocation4 + $0x68] sm:$0xff]
    %v603 = vld [vmem:[#allocation4 + $0x70] sm:$0xff]
    %v604 = vld [vmem:[#allocation4 + $0x78] sm:$0xff]
    %v605 = vld [vmem:[#allocation4 + $0x80] sm:$0xff]
    %v606 = vld [vmem:[#allocation4 + $0x88] sm:$0xff]
    %v607 = vld [vmem:[#allocation4 + $0x90] sm:$0xff]
    %v608 = vld [vmem:[#allocation4 + $0x98] sm:$0xff]
    %v609 = vld [vmem:[#allocation4 + $0xa0] sm:$0xff]
    %v610 = vld [vmem:[#allocation4 + $0xa8] sm:$0xff]
    %v611 = vld [vmem:[#allocation4 + $0xb0] sm:$0xff]
    %v612 = vld [vmem:[#allocation4 + $0xb8] sm:$0xff]
    %v613 = vld [vmem:[#allocation4 + $0xc0] sm:$0xff]
    %v614 = vld [vmem:[#allocation4 + $0xc8] sm:$0xff]
    %v615 = vld [vmem:[#allocation4 + $0xd0] sm:$0xff]
    %v616 = vld [vmem:[#allocation4 + $0xd8] sm:$0xff]
    %v617 = vld [vmem:[#allocation4 + $0xe0] sm:$0xff]
    %v618 = vld [vmem:[#allocation4 + $0xe8] sm:$0xff]
    %v619 = vld [vmem:[#allocation4 + $0xf0] sm:$0xff]
    %v620 = vld [vmem:[#allocation4 + $0xf8] sm:$0xff]
    %s621 = scalar_lea.vmem [#allocation4], 256
    %v622 = vld [vmem:[%s621] ss:$8 sm:$0x3]
    %s623 = scalar_lea.vmem [#allocation4], 257
    %v624 = vld [vmem:[%s623] ss:$8 sm:$0x3]
    %v626 = vlaneseq
    %v627 = vshrl.u32 %v626, 7
    %v628 = vsub.s32 0, %v627
    %v629 = vrot.slane %v622, %v628
    %v630 = vlaneseq
    %v631 = vshrl.u32 %v630, 7
    %v632 = vsub.s32 1, %v631
    %v633 = vrot.slane %v622, %v632
    %vm636 = vcmask 523264
    %v638 = vsel %vm636, %v587, 0
    %v641 = vsel %vm636, %v588, 0
    %643 = vmatprep.subr.mxu0 %v590
    %644 = vmatpush1.msra.mxu0 %v589
    %645 = vmatprep.subr.mxu0 %v592
    %646 = vmatpush1.msra.mxu0 %v591
    %647 = vmatprep.subr.mxu0 %v594
    %648 = vmatpush1.msra.mxu0 %v593
    %649 = vmatprep.subr.mxu0 %v596
    %650 = vmatpush1.msra.mxu0 %v595
    %651 = vmatprep.subr.mxu0 %v598
    %652 = vmatpush1.msra.mxu0 %v597
    %653 = vmatprep.subr.mxu0 %v600
    %654 = vmatpush1.msra.mxu0 %v599
    %655 = vmatprep.subr.mxu0 %v602
    %656 = vmatpush1.msra.mxu0 %v601
    %657 = vmatprep.subr.mxu0 %v604
    %658 = vmatpush1.msra.mxu0 %v603
    %659 = vmatprep.subr.mxu0 0.0
    %660 = vmatpush1.msra.mxu0 0.0
    %661 = vmatprep.subr.mxu0 0.0
    %662 = vmatpush1.msra.mxu0 0.0
    %663 = vmatprep.subr.mxu0 0.0
    %664 = vmatpush1.msra.mxu0 0.0
    %665 = vmatprep.subr.mxu0 0.0
    %666 = vmatpush1.msra.mxu0 0.0
    %667 = vmatprep.subr.mxu0 0.0
    %668 = vmatpush1.msra.mxu0 0.0
    %669 = vmatprep.subr.mxu0 0.0
    %670 = vmatpush1.msra.mxu0 0.0
    %671 = vmatprep.subr.mxu0 0.0
    %672 = vmatpush1.msra.mxu0 0.0
    %673 = vmatprep.subr.mxu0 0.0
    %674 = vmatpush1.msra.mxu0 0.0
    %675 = vmatprep.subr.mxu0 0.0
    %676 = vmatpush1.msra.mxu0 0.0
    %677 = vmatprep.subr.mxu0 0.0
    %678 = vmatpush1.msra.mxu0 0.0
    %679 = vmatprep.subr.mxu0 0.0
    %680 = vmatpush1.msra.mxu0 0.0
    %681 = vmatprep.subr.mxu0 0.0
    %682 = vmatpush1.msra.mxu0 0.0
    %683 = vmatprep.subr.mxu0 0.0
    %684 = vmatpush1.msra.mxu0 0.0
    %685 = vmatprep.subr.mxu0 0.0
    %686 = vmatpush1.msra.mxu0 0.0
    %687 = vmatprep.subr.mxu0 0.0
    %688 = vmatpush1.msra.mxu0 0.0
    %689 = vmatprep.subr.mxu0 0.0
    %690 = vmatpush1.msra.mxu0 0.0
    %691 = vmatprep.subr.mxu0 0.0
    %692 = vmatpush1.msra.mxu0 0.0
    %693 = vmatprep.subr.mxu0 0.0
    %694 = vmatpush1.msra.mxu0 0.0
    %695 = vmatprep.subr.mxu0 0.0
    %696 = vmatpush1.msra.mxu0 0.0
    %697 = vmatprep.subr.mxu0 0.0
    %698 = vmatpush1.msra.mxu0 0.0
    %699 = vmatprep.subr.mxu0 0.0
    %700 = vmatpush1.msra.mxu0 0.0
    %701 = vmatprep.subr.mxu0 0.0
    %702 = vmatpush1.msra.mxu0 0.0
    %703 = vmatprep.subr.mxu0 0.0
    %704 = vmatpush1.msra.mxu0 0.0
    %705 = vmatprep.subr.mxu0 0.0
    %706 = vmatpush1.msra.mxu0 0.0
    %707 = vmatprep.mubr.f32.mxu0 0.0
    %708 = vmatmul.mubr.f32.gmra.mrb[0].mxu0 %v638
    %v709 = vpop.f32.mrb[0].mxu0
    %v710 = vadd.f32 %v629, %v709
    %v711 = vpop.f32.mrb[0].mxu0
    %v712 = vadd.f32 %v633, %v711
    %713 = vmatprep.mubr.f32.mxu0 0.0
    %714 = vmatmul.mubr.f32.gmra.mrb[0].mxu0 %v641
    %v715 = vpop.f32.mrb[0].mxu0
    %v716 = vadd.f32 %v629, %v715
    %v717 = vpop.f32.mrb[0].mxu0
    %v718 = vadd.f32 %v633, %v717
    %719 = vdwg.mxu0
    %v721 = vlaneseq
    %v722 = vshrl.u32 %v721, 7
    %v723 = vsub.s32 0, %v722
    %v724 = vrot.slane %v624, %v723
    %v725 = vlaneseq
    %v726 = vshrl.u32 %v725, 7
    %v727 = vsub.s32 1, %v726
    %v728 = vrot.slane %v624, %v727
    %v732 = vsel %vm636, 0.0, 0
    %734 = vmatprep.subr.mxu0 %v606
    %735 = vmatpush1.msra.mxu0 %v605
    %736 = vmatprep.subr.mxu0 %v608
    %737 = vmatpush1.msra.mxu0 %v607
    %738 = vmatprep.subr.mxu0 %v610
    %739 = vmatpush1.msra.mxu0 %v609
    %740 = vmatprep.subr.mxu0 %v612
    %741 = vmatpush1.msra.mxu0 %v611
    %742 = vmatprep.subr.mxu0 %v614
    %743 = vmatpush1.msra.mxu0 %v613
    %744 = vmatprep.subr.mxu0 %v616
    %745 = vmatpush1.msra.mxu0 %v615
    %746 = vmatprep.subr.mxu0 %v618
    %747 = vmatpush1.msra.mxu0 %v617
    %748 = vmatprep.subr.mxu0 %v620
    %749 = vmatpush1.msra.mxu0 %v619
    %750 = vmatprep.subr.mxu0 0.0
    %751 = vmatpush1.msra.mxu0 0.0
    %752 = vmatprep.subr.mxu0 0.0
    %753 = vmatpush1.msra.mxu0 0.0
    %754 = vmatprep.subr.mxu0 0.0
    %755 = vmatpush1.msra.mxu0 0.0
    %756 = vmatprep.subr.mxu0 0.0
    %757 = vmatpush1.msra.mxu0 0.0
    %758 = vmatprep.subr.mxu0 0.0
    %759 = vmatpush1.msra.mxu0 0.0
    %760 = vmatprep.subr.mxu0 0.0
    %761 = vmatpush1.msra.mxu0 0.0
    %762 = vmatprep.subr.mxu0 0.0
    %763 = vmatpush1.msra.mxu0 0.0
    %764 = vmatprep.subr.mxu0 0.0
    %765 = vmatpush1.msra.mxu0 0.0
    %766 = vmatprep.subr.mxu0 0.0
    %767 = vmatpush1.msra.mxu0 0.0
    %768 = vmatprep.subr.mxu0 0.0
    %769 = vmatpush1.msra.mxu0 0.0
    %770 = vmatprep.subr.mxu0 0.0
    %771 = vmatpush1.msra.mxu0 0.0
    %772 = vmatprep.subr.mxu0 0.0
    %773 = vmatpush1.msra.mxu0 0.0
    %774 = vmatprep.subr.mxu0 0.0
    %775 = vmatpush1.msra.mxu0 0.0
    %776 = vmatprep.subr.mxu0 0.0
    %777 = vmatpush1.msra.mxu0 0.0
    %778 = vmatprep.subr.mxu0 0.0
    %779 = vmatpush1.msra.mxu0 0.0
    %780 = vmatprep.subr.mxu0 0.0
    %781 = vmatpush1.msra.mxu0 0.0
    %782 = vmatprep.subr.mxu0 0.0
    %783 = vmatpush1.msra.mxu0 0.0
    %784 = vmatprep.subr.mxu0 0.0
    %785 = vmatpush1.msra.mxu0 0.0
    %786 = vmatprep.subr.mxu0 0.0
    %787 = vmatpush1.msra.mxu0 0.0
    %788 = vmatprep.subr.mxu0 0.0
    %789 = vmatpush1.msra.mxu0 0.0
    %790 = vmatprep.subr.mxu0 0.0
    %791 = vmatpush1.msra.mxu0 0.0
    %792 = vmatprep.subr.mxu0 0.0
    %793 = vmatpush1.msra.mxu0 0.0
    %794 = vmatprep.subr.mxu0 0.0
    %795 = vmatpush1.msra.mxu0 0.0
    %796 = vmatprep.subr.mxu0 0.0
    %797 = vmatpush1.msra.mxu0 0.0
    %798 = vmatprep.mubr.f32.mxu0 0.0
    %799 = vmatmul.mubr.f32.gmra.mrb[0].mxu0 %v732
    %v800 = vpop.f32.mrb[0].mxu0
    %v801 = vadd.f32 %v724, %v800
    %v802 = vpop.f32.mrb[0].mxu0
    %v803 = vadd.f32 %v728, %v802
    %804 = vdwg.mxu0
    %v805 = vadd.f32 %v710, %v801
    %v806 = vxor.u32 %v805, 2147483648
    %v807 = vmul.f32 %v806, 1.442695
    %v808 = vpow.pop %v807
    %v809 = vadd.f32 %v808, 1.0
    %v810 = vrcp.pop %v809
    %v811 = vmul.f32 1.0, %v810
    %v812 = vmul.f32 %v811, %v803
    %v813 = vadd.f32 %v712, %v812
    %v814 = vtanh.pop %v813
    %v815 = vsub.f32 1.0, %v811
    %817 = vrot.lane.b32.xlu0 %v814, 64
    %v818 = vpop.permute.xlu0 %817
    %v820 = vmul.f32 %v815, %v818
    %v821 = vmul.f32 %v811, 0.0
    %v822 = vadd.f32 %v820, %v821
    %824 = vrot.lane.b32.xlu0 %v822, 64
    %v825 = vpop.permute.xlu0 %824
    %v826 = vsel %vm636, %v825, 0
    %828 = vmatprep.subr.mxu0 %v606
    %829 = vmatpush1.msra.mxu0 %v605
    %830 = vmatprep.subr.mxu0 %v608
    %831 = vmatpush1.msra.mxu0 %v607
    %832 = vmatprep.subr.mxu0 %v610
    %833 = vmatpush1.msra.mxu0 %v609
    %834 = vmatprep.subr.mxu0 %v612
    %835 = vmatpush1.msra.mxu0 %v611
    %836 = vmatprep.subr.mxu0 %v614
    %837 = vmatpush1.msra.mxu0 %v613
    %838 = vmatprep.subr.mxu0 %v616
    %839 = vmatpush1.msra.mxu0 %v615
    %840 = vmatprep.subr.mxu0 %v618
    %841 = vmatpush1.msra.mxu0 %v617
    %842 = vmatprep.subr.mxu0 %v620
    %843 = vmatpush1.msra.mxu0 %v619
    %844 = vmatprep.subr.mxu0 0.0
    %845 = vmatpush1.msra.mxu0 0.0
    %846 = vmatprep.subr.mxu0 0.0
    %847 = vmatpush1.msra.mxu0 0.0
    %848 = vmatprep.subr.mxu0 0.0
    %849 = vmatpush1.msra.mxu0 0.0
    %850 = vmatprep.subr.mxu0 0.0
    %851 = vmatpush1.msra.mxu0 0.0
    %852 = vmatprep.subr.mxu0 0.0
    %853 = vmatpush1.msra.mxu0 0.0
    %854 = vmatprep.subr.mxu0 0.0
    %855 = vmatpush1.msra.mxu0 0.0
    %856 = vmatprep.subr.mxu0 0.0
    %857 = vmatpush1.msra.mxu0 0.0
    %858 = vmatprep.subr.mxu0 0.0
    %859 = vmatpush1.msra.mxu0 0.0
    %860 = vmatprep.subr.mxu0 0.0
    %861 = vmatpush1.msra.mxu0 0.0
    %862 = vmatprep.subr.mxu0 0.0
    %863 = vmatpush1.msra.mxu0 0.0
    %864 = vmatprep.subr.mxu0 0.0
    %865 = vmatpush1.msra.mxu0 0.0
    %866 = vmatprep.subr.mxu0 0.0
    %867 = vmatpush1.msra.mxu0 0.0
    %868 = vmatprep.subr.mxu0 0.0
    %869 = vmatpush1.msra.mxu0 0.0
    %870 = vmatprep.subr.mxu0 0.0
    %871 = vmatpush1.msra.mxu0 0.0
    %872 = vmatprep.subr.mxu0 0.0
    %873 = vmatpush1.msra.mxu0 0.0
    %874 = vmatprep.subr.mxu0 0.0
    %875 = vmatpush1.msra.mxu0 0.0
    %876 = vmatprep.subr.mxu0 0.0
    %877 = vmatpush1.msra.mxu0 0.0
    %878 = vmatprep.subr.mxu0 0.0
    %879 = vmatpush1.msra.mxu0 0.0
    %880 = vmatprep.subr.mxu0 0.0
    %881 = vmatpush1.msra.mxu0 0.0
    %882 = vmatprep.subr.mxu0 0.0
    %883 = vmatpush1.msra.mxu0 0.0
    %884 = vmatprep.subr.mxu0 0.0
    %885 = vmatpush1.msra.mxu0 0.0
    %886 = vmatprep.subr.mxu0 0.0
    %887 = vmatpush1.msra.mxu0 0.0
    %888 = vmatprep.subr.mxu0 0.0
    %889 = vmatpush1.msra.mxu0 0.0
    %890 = vmatprep.subr.mxu0 0.0
    %891 = vmatpush1.msra.mxu0 0.0
    %892 = vmatprep.mubr.f32.mxu0 0.0
    %893 = vmatmul.mubr.f32.gmra.mrb[0].mxu0 %v826
    %v894 = vpop.f32.mrb[0].mxu0
    %v895 = vadd.f32 %v724, %v894
    %v896 = vpop.f32.mrb[0].mxu0
    %v897 = vadd.f32 %v728, %v896
    %898 = vdwg.mxu0
    %v900 = vrot.slane %v895, 6
    %v902 = vadd.f32 %v710, %v900
    %v903 = vxor.u32 %v902, 2147483648
    %v904 = vmul.f32 %v903, 1.442695
    %v905 = vpow.pop %v904
    %v906 = vadd.f32 %v905, 1.0
    %v907 = vrcp.pop %v906
    %v908 = vmul.f32 1.0, %v907
    %v910 = vrot.slane %v897, 6
    %v912 = vmul.f32 %v908, %v910
    %v913 = vadd.f32 %v712, %v912
    %v914 = vtanh.pop %v913
    %v915 = vsub.f32 1.0, %v908
    %917 = vrot.lane.b32.xlu0 %v914, 64
    %v918 = vpop.permute.xlu0 %917
    %v920 = vmul.f32 %v915, %v918
    %v921 = vrot.slane %v822, 6
    %v923 = vmul.f32 %v908, %v921
    %v924 = vadd.f32 %v920, %v923
    %v926 = vrot.slane %v924, 2
    %927 = vrot.lane.b32.xlu0 %v926, 64
    %v928 = vpop.permute.xlu0 %927
    %v929 = vsel %vm636, %v928, 0
    %931 = vmatprep.subr.mxu0 %v606
    %932 = vmatpush1.msra.mxu0 %v605
    %933 = vmatprep.subr.mxu0 %v608
    %934 = vmatpush1.msra.mxu0 %v607
    %935 = vmatprep.subr.mxu0 %v610
    %936 = vmatpush1.msra.mxu0 %v609
    %937 = vmatprep.subr.mxu0 %v612
    %938 = vmatpush1.msra.mxu0 %v611
    %939 = vmatprep.subr.mxu0 %v614
    %940 = vmatpush1.msra.mxu0 %v613
    %941 = vmatprep.subr.mxu0 %v616
    %942 = vmatpush1.msra.mxu0 %v615
    %943 = vmatprep.subr.mxu0 %v618
    %944 = vmatpush1.msra.mxu0 %v617
    %945 = vmatprep.subr.mxu0 %v620
    %946 = vmatpush1.msra.mxu0 %v619
    %947 = vmatprep.subr.mxu0 0.0
    %948 = vmatpush1.msra.mxu0 0.0
    %949 = vmatprep.subr.mxu0 0.0
    %950 = vmatpush1.msra.mxu0 0.0
    %951 = vmatprep.subr.mxu0 0.0
    %952 = vmatpush1.msra.mxu0 0.0
    %953 = vmatprep.subr.mxu0 0.0
    %954 = vmatpush1.msra.mxu0 0.0
    %955 = vmatprep.subr.mxu0 0.0
    %956 = vmatpush1.msra.mxu0 0.0
    %957 = vmatprep.subr.mxu0 0.0
    %958 = vmatpush1.msra.mxu0 0.0
    %959 = vmatprep.subr.mxu0 0.0
    %960 = vmatpush1.msra.mxu0 0.0
    %961 = vmatprep.subr.mxu0 0.0
    %962 = vmatpush1.msra.mxu0 0.0
    %963 = vmatprep.subr.mxu0 0.0
    %964 = vmatpush1.msra.mxu0 0.0
    %965 = vmatprep.subr.mxu0 0.0
    %966 = vmatpush1.msra.mxu0 0.0
    %967 = vmatprep.subr.mxu0 0.0
    %968 = vmatpush1.msra.mxu0 0.0
    %969 = vmatprep.subr.mxu0 0.0
    %970 = vmatpush1.msra.mxu0 0.0
    %971 = vmatprep.subr.mxu0 0.0
    %972 = vmatpush1.msra.mxu0 0.0
    %973 = vmatprep.subr.mxu0 0.0
    %974 = vmatpush1.msra.mxu0 0.0
    %975 = vmatprep.subr.mxu0 0.0
    %976 = vmatpush1.msra.mxu0 0.0
    %977 = vmatprep.subr.mxu0 0.0
    %978 = vmatpush1.msra.mxu0 0.0
    %979 = vmatprep.subr.mxu0 0.0
    %980 = vmatpush1.msra.mxu0 0.0
    %981 = vmatprep.subr.mxu0 0.0
    %982 = vmatpush1.msra.mxu0 0.0
    %983 = vmatprep.subr.mxu0 0.0
    %984 = vmatpush1.msra.mxu0 0.0
    %985 = vmatprep.subr.mxu0 0.0
    %986 = vmatpush1.msra.mxu0 0.0
    %987 = vmatprep.subr.mxu0 0.0
    %988 = vmatpush1.msra.mxu0 0.0
    %989 = vmatprep.subr.mxu0 0.0
    %990 = vmatpush1.msra.mxu0 0.0
    %991 = vmatprep.subr.mxu0 0.0
    %992 = vmatpush1.msra.mxu0 0.0
    %993 = vmatprep.subr.mxu0 0.0
    %994 = vmatpush1.msra.mxu0 0.0
    %995 = vmatprep.mubr.f32.mxu0 0.0
    %996 = vmatmul.mubr.f32.gmra.mrb[0].mxu0 %v929
    %v997 = vpop.f32.mrb[0].mxu0
    %v998 = vadd.f32 %v724, %v997
    %v999 = vpop.f32.mrb[0].mxu0
    %v1000 = vadd.f32 %v728, %v999
    %1001 = vdwg.mxu0
    %v1003 = vrot.slane %v998, 4
    %v1005 = vadd.f32 %v710, %v1003
    %v1006 = vxor.u32 %v1005, 2147483648
    %v1007 = vmul.f32 %v1006, 1.442695
    %v1008 = vpow.pop %v1007
    %v1009 = vadd.f32 %v1008, 1.0
    %v1010 = vrcp.pop %v1009
    %v1011 = vmul.f32 1.0, %v1010
    %v1013 = vrot.slane %v1000, 4
    %v1015 = vmul.f32 %v1011, %v1013
    %v1016 = vadd.f32 %v712, %v1015
    %v1017 = vtanh.pop %v1016
    %v1018 = vsub.f32 1.0, %v1011
    %1020 = vrot.lane.b32.xlu0 %v1017, 64
    %v1021 = vpop.permute.xlu0 %1020
    %v1023 = vmul.f32 %v1018, %v1021
    %v1024 = vrot.slane %v924, 6
    %v1026 = vmul.f32 %v1011, %v1024
    %v1027 = vadd.f32 %v1023, %v1026
    %v1029 = vrot.slane %v1027, 4
    %1030 = vrot.lane.b32.xlu0 %v1029, 64
    %v1031 = vpop.permute.xlu0 %1030
    %v1032 = vsel %vm636, %v1031, 0
    %1034 = vmatprep.subr.mxu0 %v606
    %1035 = vmatpush1.msra.mxu0 %v605
    %1036 = vmatprep.subr.mxu0 %v608
    %1037 = vmatpush1.msra.mxu0 %v607
    %1038 = vmatprep.subr.mxu0 %v610
    %1039 = vmatpush1.msra.mxu0 %v609
    %1040 = vmatprep.subr.mxu0 %v612
    %1041 = vmatpush1.msra.mxu0 %v611
    %1042 = vmatprep.subr.mxu0 %v614
    %1043 = vmatpush1.msra.mxu0 %v613
    %1044 = vmatprep.subr.mxu0 %v616
    %1045 = vmatpush1.msra.mxu0 %v615
    %1046 = vmatprep.subr.mxu0 %v618
    %1047 = vmatpush1.msra.mxu0 %v617
    %1048 = vmatprep.subr.mxu0 %v620
    %1049 = vmatpush1.msra.mxu0 %v619
    %1050 = vmatprep.subr.mxu0 0.0
    %1051 = vmatpush1.msra.mxu0 0.0
    %1052 = vmatprep.subr.mxu0 0.0
    %1053 = vmatpush1.msra.mxu0 0.0
    %1054 = vmatprep.subr.mxu0 0.0
    %1055 = vmatpush1.msra.mxu0 0.0
    %1056 = vmatprep.subr.mxu0 0.0
    %1057 = vmatpush1.msra.mxu0 0.0
    %1058 = vmatprep.subr.mxu0 0.0
    %1059 = vmatpush1.msra.mxu0 0.0
    %1060 = vmatprep.subr.mxu0 0.0
    %1061 = vmatpush1.msra.mxu0 0.0
    %1062 = vmatprep.subr.mxu0 0.0
    %1063 = vmatpush1.msra.mxu0 0.0
    %1064 = vmatprep.subr.mxu0 0.0
    %1065 = vmatpush1.msra.mxu0 0.0
    %1066 = vmatprep.subr.mxu0 0.0
    %1067 = vmatpush1.msra.mxu0 0.0
    %1068 = vmatprep.subr.mxu0 0.0
    %1069 = vmatpush1.msra.mxu0 0.0
    %1070 = vmatprep.subr.mxu0 0.0
    %1071 = vmatpush1.msra.mxu0 0.0
    %1072 = vmatprep.subr.mxu0 0.0
    %1073 = vmatpush1.msra.mxu0 0.0
    %1074 = vmatprep.subr.mxu0 0.0
    %1075 = vmatpush1.msra.mxu0 0.0
    %1076 = vmatprep.subr.mxu0 0.0
    %1077 = vmatpush1.msra.mxu0 0.0
    %1078 = vmatprep.subr.mxu0 0.0
    %1079 = vmatpush1.msra.mxu0 0.0
    %1080 = vmatprep.subr.mxu0 0.0
    %1081 = vmatpush1.msra.mxu0 0.0
    %1082 = vmatprep.subr.mxu0 0.0
    %1083 = vmatpush1.msra.mxu0 0.0
    %1084 = vmatprep.subr.mxu0 0.0
    %1085 = vmatpush1.msra.mxu0 0.0
    %1086 = vmatprep.subr.mxu0 0.0
    %1087 = vmatpush1.msra.mxu0 0.0
    %1088 = vmatprep.subr.mxu0 0.0
    %1089 = vmatpush1.msra.mxu0 0.0
    %1090 = vmatprep.subr.mxu0 0.0
    %1091 = vmatpush1.msra.mxu0 0.0
    %1092 = vmatprep.subr.mxu0 0.0
    %1093 = vmatpush1.msra.mxu0 0.0
    %1094 = vmatprep.subr.mxu0 0.0
    %1095 = vmatpush1.msra.mxu0 0.0
    %1096 = vmatprep.subr.mxu0 0.0
    %1097 = vmatpush1.msra.mxu0 0.0
    %1098 = vmatprep.mubr.f32.mxu0 0.0
    %1099 = vmatmul.mubr.f32.gmra.mrb[0].mxu0 %v1032
    %v1100 = vpop.f32.mrb[0].mxu0
    %v1101 = vadd.f32 %v724, %v1100
    %v1102 = vpop.f32.mrb[0].mxu0
    %v1103 = vadd.f32 %v728, %v1102
    %1104 = vdwg.mxu0
    %v1106 = vrot.slane %v1101, 2
    %v1108 = vadd.f32 %v710, %v1106
    %v1109 = vxor.u32 %v1108, 2147483648
    %v1110 = vmul.f32 %v1109, 1.442695
    %v1111 = vpow.pop %v1110
    %v1112 = vadd.f32 %v1111, 1.0
    %v1113 = vrcp.pop %v1112
    %v1114 = vmul.f32 1.0, %v1113
    %v1116 = vrot.slane %v1103, 2
    %v1118 = vmul.f32 %v1114, %v1116
    %v1119 = vadd.f32 %v712, %v1118
    %v1120 = vtanh.pop %v1119
    %v1121 = vsub.f32 1.0, %v1114
    %1123 = vrot.lane.b32.xlu0 %v1120, 64
    %v1124 = vpop.permute.xlu0 %1123
    %v1126 = vmul.f32 %v1121, %v1124
    %v1127 = vrot.slane %v1027, 6
    %v1129 = vmul.f32 %v1114, %v1127
    %v1130 = vadd.f32 %v1126, %v1129
    %v1132 = vrot.slane %v1130, 6
    %1133 = vrot.lane.b32.xlu0 %v1132, 64
    %v1134 = vpop.permute.xlu0 %1133
    %v1135 = vsel %vm636, %v1134, 0
    %1137 = vmatprep.subr.mxu0 %v606
    %1138 = vmatpush1.msra.mxu0 %v605
    %1139 = vmatprep.subr.mxu0 %v608
    %1140 = vmatpush1.msra.mxu0 %v607
    %1141 = vmatprep.subr.mxu0 %v610
    %1142 = vmatpush1.msra.mxu0 %v609
    %1143 = vmatprep.subr.mxu0 %v612
    %1144 = vmatpush1.msra.mxu0 %v611
    %1145 = vmatprep.subr.mxu0 %v614
    %1146 = vmatpush1.msra.mxu0 %v613
    %1147 = vmatprep.subr.mxu0 %v616
    %1148 = vmatpush1.msra.mxu0 %v615
    %1149 = vmatprep.subr.mxu0 %v618
    %1150 = vmatpush1.msra.mxu0 %v617
    %1151 = vmatprep.subr.mxu0 %v620
    %1152 = vmatpush1.msra.mxu0 %v619
    %1153 = vmatprep.subr.mxu0 0.0
    %1154 = vmatpush1.msra.mxu0 0.0
    %1155 = vmatprep.subr.mxu0 0.0
    %1156 = vmatpush1.msra.mxu0 0.0
    %1157 = vmatprep.subr.mxu0 0.0
    %1158 = vmatpush1.msra.mxu0 0.0
    %1159 = vmatprep.subr.mxu0 0.0
    %1160 = vmatpush1.msra.mxu0 0.0
    %1161 = vmatprep.subr.mxu0 0.0
    %1162 = vmatpush1.msra.mxu0 0.0
    %1163 = vmatprep.subr.mxu0 0.0
    %1164 = vmatpush1.msra.mxu0 0.0
    %1165 = vmatprep.subr.mxu0 0.0
    %1166 = vmatpush1.msra.mxu0 0.0
    %1167 = vmatprep.subr.mxu0 0.0
    %1168 = vmatpush1.msra.mxu0 0.0
    %1169 = vmatprep.subr.mxu0 0.0
    %1170 = vmatpush1.msra.mxu0 0.0
    %1171 = vmatprep.subr.mxu0 0.0
    %1172 = vmatpush1.msra.mxu0 0.0
    %1173 = vmatprep.subr.mxu0 0.0
    %1174 = vmatpush1.msra.mxu0 0.0
    %1175 = vmatprep.subr.mxu0 0.0
    %1176 = vmatpush1.msra.mxu0 0.0
    %1177 = vmatprep.subr.mxu0 0.0
    %1178 = vmatpush1.msra.mxu0 0.0
    %1179 = vmatprep.subr.mxu0 0.0
    %1180 = vmatpush1.msra.mxu0 0.0
    %1181 = vmatprep.subr.mxu0 0.0
    %1182 = vmatpush1.msra.mxu0 0.0
    %1183 = vmatprep.subr.mxu0 0.0
    %1184 = vmatpush1.msra.mxu0 0.0
    %1185 = vmatprep.subr.mxu0 0.0
    %1186 = vmatpush1.msra.mxu0 0.0
    %1187 = vmatprep.subr.mxu0 0.0
    %1188 = vmatpush1.msra.mxu0 0.0
    %1189 = vmatprep.subr.mxu0 0.0
    %1190 = vmatpush1.msra.mxu0 0.0
    %1191 = vmatprep.subr.mxu0 0.0
    %1192 = vmatpush1.msra.mxu0 0.0
    %1193 = vmatprep.subr.mxu0 0.0
    %1194 = vmatpush1.msra.mxu0 0.0
    %1195 = vmatprep.subr.mxu0 0.0
    %1196 = vmatpush1.msra.mxu0 0.0
    %1197 = vmatprep.subr.mxu0 0.0
    %1198 = vmatpush1.msra.mxu0 0.0
    %1199 = vmatprep.subr.mxu0 0.0
    %1200 = vmatpush1.msra.mxu0 0.0
    %1201 = vmatprep.mubr.f32.mxu0 0.0
    %1202 = vmatmul.mubr.f32.gmra.mrb[0].mxu0 %v1135
    %v1203 = vpop.f32.mrb[0].mxu0
    %v1204 = vadd.f32 %v724, %v1203
    %v1205 = vpop.f32.mrb[0].mxu0
    %v1206 = vadd.f32 %v728, %v1205
    %1207 = vdwg.mxu0
    %v1208 = vadd.f32 %v716, %v1204
    %v1209 = vxor.u32 %v1208, 2147483648
    %v1210 = vmul.f32 %v1209, 1.442695
    %v1211 = vpow.pop %v1210
    %v1212 = vadd.f32 %v1211, 1.0
    %v1213 = vrcp.pop %v1212
    %v1214 = vmul.f32 1.0, %v1213
    %v1215 = vmul.f32 %v1214, %v1206
    %v1216 = vadd.f32 %v718, %v1215
    %v1217 = vtanh.pop %v1216
    %v1218 = vsub.f32 1.0, %v1214
    %1220 = vrot.lane.b32.xlu0 %v1217, 64
    %v1221 = vpop.permute.xlu0 %1220
    %v1223 = vmul.f32 %v1218, %v1221
    %v1225 = vmul.f32 %v1214, %v1132
    %v1226 = vadd.f32 %v1223, %v1225
    %1228 = vrot.lane.b32.xlu0 %v1226, 64
    %v1229 = vpop.permute.xlu0 %1228
    %v1230 = vsel %vm636, %v1229, 0
    %1232 = vmatprep.subr.mxu0 %v606
    %1233 = vmatpush1.msra.mxu0 %v605
    %1234 = vmatprep.subr.mxu0 %v608
    %1235 = vmatpush1.msra.mxu0 %v607
    %1236 = vmatprep.subr.mxu0 %v610
    %1237 = vmatpush1.msra.mxu0 %v609
    %1238 = vmatprep.subr.mxu0 %v612
    %1239 = vmatpush1.msra.mxu0 %v611
    %1240 = vmatprep.subr.mxu0 %v614
    %1241 = vmatpush1.msra.mxu0 %v613
    %1242 = vmatprep.subr.mxu0 %v616
    %1243 = vmatpush1.msra.mxu0 %v615
    %1244 = vmatprep.subr.mxu0 %v618
    %1245 = vmatpush1.msra.mxu0 %v617
    %1246 = vmatprep.subr.mxu0 %v620
    %1247 = vmatpush1.msra.mxu0 %v619
    %1248 = vmatprep.subr.mxu0 0.0
    %1249 = vmatpush1.msra.mxu0 0.0
    %1250 = vmatprep.subr.mxu0 0.0
    %1251 = vmatpush1.msra.mxu0 0.0
    %1252 = vmatprep.subr.mxu0 0.0
    %1253 = vmatpush1.msra.mxu0 0.0
    %1254 = vmatprep.subr.mxu0 0.0
    %1255 = vmatpush1.msra.mxu0 0.0
    %1256 = vmatprep.subr.mxu0 0.0
    %1257 = vmatpush1.msra.mxu0 0.0
    %1258 = vmatprep.subr.mxu0 0.0
    %1259 = vmatpush1.msra.mxu0 0.0
    %1260 = vmatprep.subr.mxu0 0.0
    %1261 = vmatpush1.msra.mxu0 0.0
    %1262 = vmatprep.subr.mxu0 0.0
    %1263 = vmatpush1.msra.mxu0 0.0
    %1264 = vmatprep.subr.mxu0 0.0
    %1265 = vmatpush1.msra.mxu0 0.0
    %1266 = vmatprep.subr.mxu0 0.0
    %1267 = vmatpush1.msra.mxu0 0.0
    %1268 = vmatprep.subr.mxu0 0.0
    %1269 = vmatpush1.msra.mxu0 0.0
    %1270 = vmatprep.subr.mxu0 0.0
    %1271 = vmatpush1.msra.mxu0 0.0
    %1272 = vmatprep.subr.mxu0 0.0
    %1273 = vmatpush1.msra.mxu0 0.0
    %1274 = vmatprep.subr.mxu0 0.0
    %1275 = vmatpush1.msra.mxu0 0.0
    %1276 = vmatprep.subr.mxu0 0.0
    %1277 = vmatpush1.msra.mxu0 0.0
    %1278 = vmatprep.subr.mxu0 0.0
    %1279 = vmatpush1.msra.mxu0 0.0
    %1280 = vmatprep.subr.mxu0 0.0
    %1281 = vmatpush1.msra.mxu0 0.0
    %1282 = vmatprep.subr.mxu0 0.0
    %1283 = vmatpush1.msra.mxu0 0.0
    %1284 = vmatprep.subr.mxu0 0.0
    %1285 = vmatpush1.msra.mxu0 0.0
    %1286 = vmatprep.subr.mxu0 0.0
    %1287 = vmatpush1.msra.mxu0 0.0
    %1288 = vmatprep.subr.mxu0 0.0
    %1289 = vmatpush1.msra.mxu0 0.0
    %1290 = vmatprep.subr.mxu0 0.0
    %1291 = vmatpush1.msra.mxu0 0.0
    %1292 = vmatprep.subr.mxu0 0.0
    %1293 = vmatpush1.msra.mxu0 0.0
    %1294 = vmatprep.subr.mxu0 0.0
    %1295 = vmatpush1.msra.mxu0 0.0
    %1296 = vmatprep.mubr.f32.mxu0 0.0
    %1297 = vmatmul.mubr.f32.gmra.mrb[0].mxu0 %v1230
    %v1298 = vpop.f32.mrb[0].mxu0
    %v1299 = vadd.f32 %v724, %v1298
    %v1300 = vpop.f32.mrb[0].mxu0
    %v1301 = vadd.f32 %v728, %v1300
    %1302 = vdwg.mxu0
    %v1304 = vrot.slane %v1299, 6
    %v1306 = vadd.f32 %v716, %v1304
    %v1307 = vxor.u32 %v1306, 2147483648
    %v1308 = vmul.f32 %v1307, 1.442695
    %v1309 = vpow.pop %v1308
    %v1310 = vadd.f32 %v1309, 1.0
    %v1311 = vrcp.pop %v1310
    %v1312 = vmul.f32 1.0, %v1311
    %v1314 = vrot.slane %v1301, 6
    %v1316 = vmul.f32 %v1312, %v1314
    %v1317 = vadd.f32 %v718, %v1316
    %v1318 = vtanh.pop %v1317
    %v1319 = vsub.f32 1.0, %v1312
    %1321 = vrot.lane.b32.xlu0 %v1318, 64
    %v1322 = vpop.permute.xlu0 %1321
    %v1324 = vmul.f32 %v1319, %v1322
    %v1325 = vrot.slane %v1226, 6
    %v1327 = vmul.f32 %v1312, %v1325
    %v1328 = vadd.f32 %v1324, %v1327
    %v1330 = vrot.slane %v1328, 2
    %1331 = vrot.lane.b32.xlu0 %v1330, 64
    %v1332 = vpop.permute.xlu0 %1331
    %v1333 = vsel %vm636, %v1332, 0
    %1335 = vmatprep.subr.mxu0 %v606
    %1336 = vmatpush1.msra.mxu0 %v605
    %1337 = vmatprep.subr.mxu0 %v608
    %1338 = vmatpush1.msra.mxu0 %v607
    %1339 = vmatprep.subr.mxu0 %v610
    %1340 = vmatpush1.msra.mxu0 %v609
    %1341 = vmatprep.subr.mxu0 %v612
    %1342 = vmatpush1.msra.mxu0 %v611
    %1343 = vmatprep.subr.mxu0 %v614
    %1344 = vmatpush1.msra.mxu0 %v613
    %1345 = vmatprep.subr.mxu0 %v616
    %1346 = vmatpush1.msra.mxu0 %v615
    %1347 = vmatprep.subr.mxu0 %v618
    %1348 = vmatpush1.msra.mxu0 %v617
    %1349 = vmatprep.subr.mxu0 %v620
    %1350 = vmatpush1.msra.mxu0 %v619
    %1351 = vmatprep.subr.mxu0 0.0
    %1352 = vmatpush1.msra.mxu0 0.0
    %1353 = vmatprep.subr.mxu0 0.0
    %1354 = vmatpush1.msra.mxu0 0.0
    %1355 = vmatprep.subr.mxu0 0.0
    %1356 = vmatpush1.msra.mxu0 0.0
    %1357 = vmatprep.subr.mxu0 0.0
    %1358 = vmatpush1.msra.mxu0 0.0
    %1359 = vmatprep.subr.mxu0 0.0
    %1360 = vmatpush1.msra.mxu0 0.0
    %1361 = vmatprep.subr.mxu0 0.0
    %1362 = vmatpush1.msra.mxu0 0.0
    %1363 = vmatprep.subr.mxu0 0.0
    %1364 = vmatpush1.msra.mxu0 0.0
    %1365 = vmatprep.subr.mxu0 0.0
    %1366 = vmatpush1.msra.mxu0 0.0
    %1367 = vmatprep.subr.mxu0 0.0
    %1368 = vmatpush1.msra.mxu0 0.0
    %1369 = vmatprep.subr.mxu0 0.0
    %1370 = vmatpush1.msra.mxu0 0.0
    %1371 = vmatprep.subr.mxu0 0.0
    %1372 = vmatpush1.msra.mxu0 0.0
    %1373 = vmatprep.subr.mxu0 0.0
    %1374 = vmatpush1.msra.mxu0 0.0
    %1375 = vmatprep.subr.mxu0 0.0
    %1376 = vmatpush1.msra.mxu0 0.0
    %1377 = vmatprep.subr.mxu0 0.0
    %1378 = vmatpush1.msra.mxu0 0.0
    %1379 = vmatprep.subr.mxu0 0.0
    %1380 = vmatpush1.msra.mxu0 0.0
    %1381 = vmatprep.subr.mxu0 0.0
    %1382 = vmatpush1.msra.mxu0 0.0
    %1383 = vmatprep.subr.mxu0 0.0
    %1384 = vmatpush1.msra.mxu0 0.0
    %1385 = vmatprep.subr.mxu0 0.0
    %1386 = vmatpush1.msra.mxu0 0.0
    %1387 = vmatprep.subr.mxu0 0.0
    %1388 = vmatpush1.msra.mxu0 0.0
    %1389 = vmatprep.subr.mxu0 0.0
    %1390 = vmatpush1.msra.mxu0 0.0
    %1391 = vmatprep.subr.mxu0 0.0
    %1392 = vmatpush1.msra.mxu0 0.0
    %1393 = vmatprep.subr.mxu0 0.0
    %1394 = vmatpush1.msra.mxu0 0.0
    %1395 = vmatprep.subr.mxu0 0.0
    %1396 = vmatpush1.msra.mxu0 0.0
    %1397 = vmatprep.subr.mxu0 0.0
    %1398 = vmatpush1.msra.mxu0 0.0
    %1399 = vmatprep.mubr.f32.mxu0 0.0
    %1400 = vmatmul.mubr.f32.gmra.mrb[0].mxu0 %v1333
    %v1401 = vpop.f32.mrb[0].mxu0
    %v1402 = vadd.f32 %v724, %v1401
    %v1403 = vpop.f32.mrb[0].mxu0
    %v1404 = vadd.f32 %v728, %v1403
    %1405 = vdwg.mxu0
    %v1407 = vrot.slane %v1402, 4
    %v1409 = vadd.f32 %v716, %v1407
    %v1410 = vxor.u32 %v1409, 2147483648
    %v1411 = vmul.f32 %v1410, 1.442695
    %v1412 = vpow.pop %v1411
    %v1413 = vadd.f32 %v1412, 1.0
    %v1414 = vrcp.pop %v1413
    %v1415 = vmul.f32 1.0, %v1414
    %v1417 = vrot.slane %v1404, 4
    %v1419 = vmul.f32 %v1415, %v1417
    %v1420 = vadd.f32 %v718, %v1419
    %v1421 = vtanh.pop %v1420
    %v1422 = vsub.f32 1.0, %v1415
    %1424 = vrot.lane.b32.xlu0 %v1421, 64
    %v1425 = vpop.permute.xlu0 %1424
    %v1427 = vmul.f32 %v1422, %v1425
    %v1428 = vrot.slane %v1328, 6
    %v1430 = vmul.f32 %v1415, %v1428
    %v1431 = vadd.f32 %v1427, %v1430
    %v1433 = vrot.slane %v1431, 4
    %1434 = vrot.lane.b32.xlu0 %v1433, 64
    %v1435 = vpop.permute.xlu0 %1434
    %v1436 = vsel %vm636, %v1435, 0
    %1438 = vmatprep.subr.mxu0 %v606
    %1439 = vmatpush1.msra.mxu0 %v605
    %1440 = vmatprep.subr.mxu0 %v608
    %1441 = vmatpush1.msra.mxu0 %v607
    %1442 = vmatprep.subr.mxu0 %v610
    %1443 = vmatpush1.msra.mxu0 %v609
    %1444 = vmatprep.subr.mxu0 %v612
    %1445 = vmatpush1.msra.mxu0 %v611
    %1446 = vmatprep.subr.mxu0 %v614
    %1447 = vmatpush1.msra.mxu0 %v613
    %1448 = vmatprep.subr.mxu0 %v616
    %1449 = vmatpush1.msra.mxu0 %v615
    %1450 = vmatprep.subr.mxu0 %v618
    %1451 = vmatpush1.msra.mxu0 %v617
    %1452 = vmatprep.subr.mxu0 %v620
    %1453 = vmatpush1.msra.mxu0 %v619
    %1454 = vmatprep.subr.mxu0 0.0
    %1455 = vmatpush1.msra.mxu0 0.0
    %1456 = vmatprep.subr.mxu0 0.0
    %1457 = vmatpush1.msra.mxu0 0.0
    %1458 = vmatprep.subr.mxu0 0.0
    %1459 = vmatpush1.msra.mxu0 0.0
    %1460 = vmatprep.subr.mxu0 0.0
    %1461 = vmatpush1.msra.mxu0 0.0
    %1462 = vmatprep.subr.mxu0 0.0
    %1463 = vmatpush1.msra.mxu0 0.0
    %1464 = vmatprep.subr.mxu0 0.0
    %1465 = vmatpush1.msra.mxu0 0.0
    %1466 = vmatprep.subr.mxu0 0.0
    %1467 = vmatpush1.msra.mxu0 0.0
    %1468 = vmatprep.subr.mxu0 0.0
    %1469 = vmatpush1.msra.mxu0 0.0
    %1470 = vmatprep.subr.mxu0 0.0
    %1471 = vmatpush1.msra.mxu0 0.0
    %1472 = vmatprep.subr.mxu0 0.0
    %1473 = vmatpush1.msra.mxu0 0.0
    %1474 = vmatprep.subr.mxu0 0.0
    %1475 = vmatpush1.msra.mxu0 0.0
    %1476 = vmatprep.subr.mxu0 0.0
    %1477 = vmatpush1.msra.mxu0 0.0
    %1478 = vmatprep.subr.mxu0 0.0
    %1479 = vmatpush1.msra.mxu0 0.0
    %1480 = vmatprep.subr.mxu0 0.0
    %1481 = vmatpush1.msra.mxu0 0.0
    %1482 = vmatprep.subr.mxu0 0.0
    %1483 = vmatpush1.msra.mxu0 0.0
    %1484 = vmatprep.subr.mxu0 0.0
    %1485 = vmatpush1.msra.mxu0 0.0
    %1486 = vmatprep.subr.mxu0 0.0
    %1487 = vmatpush1.msra.mxu0 0.0
    %1488 = vmatprep.subr.mxu0 0.0
    %1489 = vmatpush1.msra.mxu0 0.0
    %1490 = vmatprep.subr.mxu0 0.0
    %1491 = vmatpush1.msra.mxu0 0.0
    %1492 = vmatprep.subr.mxu0 0.0
    %1493 = vmatpush1.msra.mxu0 0.0
    %1494 = vmatprep.subr.mxu0 0.0
    %1495 = vmatpush1.msra.mxu0 0.0
    %1496 = vmatprep.subr.mxu0 0.0
    %1497 = vmatpush1.msra.mxu0 0.0
    %1498 = vmatprep.subr.mxu0 0.0
    %1499 = vmatpush1.msra.mxu0 0.0
    %1500 = vmatprep.subr.mxu0 0.0
    %1501 = vmatpush1.msra.mxu0 0.0
    %1502 = vmatprep.mubr.f32.mxu0 0.0
    %1503 = vmatmul.mubr.f32.gmra.mrb[0].mxu0 %v1436
    %v1504 = vpop.f32.mrb[0].mxu0
    %v1505 = vadd.f32 %v724, %v1504
    %v1506 = vpop.f32.mrb[0].mxu0
    %v1507 = vadd.f32 %v728, %v1506
    %1508 = vdwg.mxu0
    %v1510 = vrot.slane %v1505, 2
    %v1512 = vadd.f32 %v716, %v1510
    %v1513 = vxor.u32 %v1512, 2147483648
    %v1514 = vmul.f32 %v1513, 1.442695
    %v1515 = vpow.pop %v1514
    %v1516 = vadd.f32 %v1515, 1.0
    %v1517 = vrcp.pop %v1516
    %v1518 = vmul.f32 1.0, %v1517
    %v1520 = vrot.slane %v1507, 2
    %v1522 = vmul.f32 %v1518, %v1520
    %v1523 = vadd.f32 %v718, %v1522
    %v1524 = vtanh.pop %v1523
    %v1525 = vsub.f32 1.0, %v1518
    %1527 = vrot.lane.b32.xlu0 %v1524, 64
    %v1528 = vpop.permute.xlu0 %1527
    %v1530 = vmul.f32 %v1525, %v1528
    %v1531 = vrot.slane %v1431, 6
    %v1533 = vmul.f32 %v1518, %v1531
    %v1534 = vadd.f32 %v1530, %v1533
    %v1535 = vld [vmem:[#allocation2 + $0x78] sm:$0xff]
    %v1536 = vld [vmem:[#allocation2 + $0x80] sm:$0xff]
    %v1537 = vld [vmem:[#allocation2 + $0x88] sm:$0xff]
    %v1538 = vld [vmem:[#allocation2 + $0x90] sm:$0xff]
    %v1539 = vld [vmem:[#allocation2 + $0x98] sm:$0xff]
    %v1540 = vld [vmem:[#allocation2 + $0xa0] sm:$0xff]
    %v1541 = vld [vmem:[#allocation2 + $0xa8] sm:$0xff]
    %v1542 = vld [vmem:[#allocation2 + $0xb0] sm:$0xff]
    %v1543 = vld [vmem:[#allocation2 + $0xc2] sm:$0x1]
    %v1544 = vlaneseq
    %v1545 = vshrl.u32 %v1544, 7
    %v1546 = vsub.s32 0, %v1545
    %v1547 = vrot.slane %v1543, %v1546
    %v1549 = vrot.slane %v1534, 6
    %1550 = vrot.lane.b32.xlu0 %v1549, 64
    %v1551 = vpop.permute.xlu0 %1550
    %v1552 = vsel %vm636, %v1551, 0
    %1554 = vmatprep.subr.mxu0 0.0
    %1555 = vmatpush1.msra.mxu0 %v1535
    %1556 = vmatprep.subr.mxu0 0.0
    %1557 = vmatpush1.msra.mxu0 %v1536
    %1558 = vmatprep.subr.mxu0 0.0
    %1559 = vmatpush1.msra.mxu0 %v1537
    %1560 = vmatprep.subr.mxu0 0.0
    %1561 = vmatpush1.msra.mxu0 %v1538
    %1562 = vmatprep.subr.mxu0 0.0
    %1563 = vmatpush1.msra.mxu0 %v1539
    %1564 = vmatprep.subr.mxu0 0.0
    %1565 = vmatpush1.msra.mxu0 %v1540
    %1566 = vmatprep.subr.mxu0 0.0
    %1567 = vmatpush1.msra.mxu0 %v1541
    %1568 = vmatprep.subr.mxu0 0.0
    %1569 = vmatpush1.msra.mxu0 %v1542
    %1570 = vmatprep.subr.mxu0 0.0
    %1571 = vmatpush1.msra.mxu0 0.0
    %1572 = vmatprep.subr.mxu0 0.0
    %1573 = vmatpush1.msra.mxu0 0.0
    %1574 = vmatprep.subr.mxu0 0.0
    %1575 = vmatpush1.msra.mxu0 0.0
    %1576 = vmatprep.subr.mxu0 0.0
    %1577 = vmatpush1.msra.mxu0 0.0
    %1578 = vmatprep.subr.mxu0 0.0
    %1579 = vmatpush1.msra.mxu0 0.0
    %1580 = vmatprep.subr.mxu0 0.0
    %1581 = vmatpush1.msra.mxu0 0.0
    %1582 = vmatprep.subr.mxu0 0.0
    %1583 = vmatpush1.msra.mxu0 0.0
    %1584 = vmatprep.subr.mxu0 0.0
    %1585 = vmatpush1.msra.mxu0 0.0
    %1586 = vmatprep.subr.mxu0 0.0
    %1587 = vmatpush1.msra.mxu0 0.0
    %1588 = vmatprep.subr.mxu0 0.0
    %1589 = vmatpush1.msra.mxu0 0.0
    %1590 = vmatprep.subr.mxu0 0.0
    %1591 = vmatpush1.msra.mxu0 0.0
    %1592 = vmatprep.subr.mxu0 0.0
    %1593 = vmatpush1.msra.mxu0 0.0
    %1594 = vmatprep.subr.mxu0 0.0
    %1595 = vmatpush1.msra.mxu0 0.0
    %1596 = vmatprep.subr.mxu0 0.0
    %1597 = vmatpush1.msra.mxu0 0.0
    %1598 = vmatprep.subr.mxu0 0.0
    %1599 = vmatpush1.msra.mxu0 0.0
    %1600 = vmatprep.subr.mxu0 0.0
    %1601 = vmatpush1.msra.mxu0 0.0
    %1602 = vmatprep.subr.mxu0 0.0
    %1603 = vmatpush1.msra.mxu0 0.0
    %1604 = vmatprep.subr.mxu0 0.0
    %1605 = vmatpush1.msra.mxu0 0.0
    %1606 = vmatprep.subr.mxu0 0.0
    %1607 = vmatpush1.msra.mxu0 0.0
    %1608 = vmatprep.subr.mxu0 0.0
    %1609 = vmatpush1.msra.mxu0 0.0
    %1610 = vmatprep.subr.mxu0 0.0
    %1611 = vmatpush1.msra.mxu0 0.0
    %1612 = vmatprep.subr.mxu0 0.0
    %1613 = vmatpush1.msra.mxu0 0.0
    %1614 = vmatprep.subr.mxu0 0.0
    %1615 = vmatpush1.msra.mxu0 0.0
    %1616 = vmatprep.subr.mxu0 0.0
    %1617 = vmatpush1.msra.mxu0 0.0
    %1618 = vmatprep.mubr.f32.mxu0 0.0
    %1619 = vmatmul.mubr.f32.gmra.mrb[0].mxu0 %v1552
    %v1620 = vpop.f32.mrb[0].mxu0
    %v1621 = vadd.f32 %v1547, %v1620
    %v1622 = vpop.f32.mrb[0].mxu0
    %1623 = vdwg.mxu0
    %v1624 = vmax.f32 %v1621, 0.0
    %v1625 = vld [vmem:[#allocation2 + $0xb8] sm:$0xff]
    %v1626 = vld [vmem:[#allocation2 + $0xc3] sm:$0x1]
    %v1627 = vlaneseq
    %v1628 = vshrl.u32 %v1627, 7
    %v1629 = vsub.s32 0, %v1628
    %v1630 = vrot.slane %v1626, %v1629
    %1631 = vmatprep.subr.mxu0 0.0
    %1632 = vmatpush1.xpose.msra.mxu0 %v1625
    %1633 = vmatprep.subr.mxu0 0.0
    %1634 = vmatpush1.xpose.msra.mxu0 0.0
    %1635 = vmatprep.subr.mxu0 0.0
    %1636 = vmatpush1.xpose.msra.mxu0 0.0
    %1637 = vmatprep.subr.mxu0 0.0
    %1638 = vmatpush1.xpose.msra.mxu0 0.0
    %1639 = vmatprep.subr.mxu0 0.0
    %1640 = vmatpush1.xpose.msra.mxu0 0.0
    %1641 = vmatprep.subr.mxu0 0.0
    %1642 = vmatpush1.xpose.msra.mxu0 0.0
    %1643 = vmatprep.subr.mxu0 0.0
    %1644 = vmatpush1.xpose.msra.mxu0 0.0
    %1645 = vmatprep.subr.mxu0 0.0
    %1646 = vmatpush1.xpose.msra.mxu0 0.0
    %1647 = vmatprep.subr.mxu0 0.0
    %1648 = vmatpush1.xpose.msra.mxu0 0.0
    %1649 = vmatprep.subr.mxu0 0.0
    %1650 = vmatpush1.xpose.msra.mxu0 0.0
    %1651 = vmatprep.subr.mxu0 0.0
    %1652 = vmatpush1.xpose.msra.mxu0 0.0
    %1653 = vmatprep.subr.mxu0 0.0
    %1654 = vmatpush1.xpose.msra.mxu0 0.0
    %1655 = vmatprep.subr.mxu0 0.0
    %1656 = vmatpush1.xpose.msra.mxu0 0.0
    %1657 = vmatprep.subr.mxu0 0.0
    %1658 = vmatpush1.xpose.msra.mxu0 0.0
    %1659 = vmatprep.subr.mxu0 0.0
    %1660 = vmatpush1.xpose.msra.mxu0 0.0
    %1661 = vmatprep.subr.mxu0 0.0
    %1662 = vmatpush1.xpose.msra.mxu0 0.0
    %1663 = vmatprep.subr.mxu0 0.0
    %1664 = vmatpush1.xpose.msra.mxu0 0.0
    %1665 = vmatprep.subr.mxu0 0.0
    %1666 = vmatpush1.xpose.msra.mxu0 0.0
    %1667 = vmatprep.subr.mxu0 0.0
    %1668 = vmatpush1.xpose.msra.mxu0 0.0
    %1669 = vmatprep.subr.mxu0 0.0
    %1670 = vmatpush1.xpose.msra.mxu0 0.0
    %1671 = vmatprep.subr.mxu0 0.0
    %1672 = vmatpush1.xpose.msra.mxu0 0.0
    %1673 = vmatprep.subr.mxu0 0.0
    %1674 = vmatpush1.xpose.msra.mxu0 0.0
    %1675 = vmatprep.subr.mxu0 0.0
    %1676 = vmatpush1.xpose.msra.mxu0 0.0
    %1677 = vmatprep.subr.mxu0 0.0
    %1678 = vmatpush1.xpose.msra.mxu0 0.0
    %1679 = vmatprep.subr.mxu0 0.0
    %1680 = vmatpush1.xpose.msra.mxu0 0.0
    %1681 = vmatprep.subr.mxu0 0.0
    %1682 = vmatpush1.xpose.msra.mxu0 0.0
    %1683 = vmatprep.subr.mxu0 0.0
    %1684 = vmatpush1.xpose.msra.mxu0 0.0
    %1685 = vmatprep.subr.mxu0 0.0
    %1686 = vmatpush1.xpose.msra.mxu0 0.0
    %1687 = vmatprep.subr.mxu0 0.0
    %1688 = vmatpush1.xpose.msra.mxu0 0.0
    %1689 = vmatprep.subr.mxu0 0.0
    %1690 = vmatpush1.xpose.msra.mxu0 0.0
    %1691 = vmatprep.subr.mxu0 0.0
    %1692 = vmatpush1.xpose.msra.mxu0 0.0
    %1693 = vmatprep.subr.mxu0 0.0
    %1694 = vmatpush1.xpose.msra.mxu0 0.0
    %1695 = vmatprep.mubr.f32.mxu0 0.0
    %1696 = vmatmul.mubr.f32.gmra.mrb[0].mxu0 %v1624
    %v1697 = vpop.f32.mrb[0].mxu0
    %v1698 = vadd.f32 %v1630, %v1697
    %v1699 = vpop.f32.mrb[0].mxu0
    %1700 = vdwg.mxu0
    %vm1701 = vcmask 58368
    %1702 = vst.msk [vmem:[%s3] sm:$0x3] %vm1701, %v1698
    // Predicated region
    $region22: #{a3c_forward.1} parent=1 // pred_check
      _
    $region23: #{a3c_forward.1} parent=1 // pred_check_branch
      %1704 = sbr.rel (0) target = $region25
    $region24: #{a3c_forward.1} parent=1 // pred_region
      _
    $region25: #{a3c_forward.1} parent=1 // pred_fallthru
      _
    // Predicated region
    $region26: #{a3c_forward.1} parent=1 // pred_check
      _
    $region27: #{a3c_forward.1} parent=1 // pred_check_branch
      %1706 = sbr.rel (0) target = $region29
    $region28: #{a3c_forward.1} parent=1 // pred_region
      _
    $region29: #{a3c_forward.1} parent=1 // pred_fallthru
      _
    %1707 = vsyncpa [#allocation3], 1
    %1708 = vsyncpa [#allocation5], 1

</llo_original>
